<compile_context>
chip_gen: v6e
topology: v6e:2x2x1
jax: 0.10.0
libtpu: 0.0.40
codegen_flags: <defaults>
</compile_context>

<pallas_src>
import functools
import math

import jax
import jax.numpy as jnp
from jax.experimental import pallas as pl
from jax.experimental.pallas import tpu as pltpu

_LANE = 128


def _sawtooth_kernel(ph0_ref, f0_ref, triu_ref, tril_ref, sig_ref, fin_ref, carry_ref,
                     *, inv_fs, is_reversed):
    """One grid step = one (sb, 128) tile (sb*128 consecutive samples of one batch row)."""
    b = pl.program_id(0)
    t = pl.program_id(1)

    # (Re)initialize the carried phase with this batch's initial phase on the first T block.
    @pl.when(t == 0)
    def _():
        carry_ref[...] = jnp.zeros((1, 1), jnp.float32) + ph0_ref[b]

    x = f0_ref[...] * inv_fs                                    # (sb, 128) cycles per sample

    # Within-row inclusive prefix sum (time runs along lanes): MXU matmul, M = sb.
    c = jnp.dot(x, triu_ref[...], preferred_element_type=jnp.float32,
                precision=jax.lax.Precision.HIGHEST)
    # Exclusive prefix of the per-row sums (time runs down the sublanes):
    # strict-lower-tri (sb,sb) @ x, then a lane reduction.  Independent of `c`, so the two
    # MXU ops can overlap.
    p = jnp.sum(jnp.dot(tril_ref[...], x, preferred_element_type=jnp.float32,
                        precision=jax.lax.Precision.HIGHEST),
                axis=1, keepdims=True)                          # (sb, 1)

    total = c + p + carry_ref[...]                              # (sb,128) + (sb,1) + (1,1)
    frac = total - jnp.floor(total)                             # == (cumsum + phase0) % 1

    # Fused output math:
    #   reversed:  (2*pi - 2*pi*frac)/pi - 1 = 1 - 2*frac
    #   forward:   (2*pi*frac)/pi - 1       = 2*frac - 1
    if is_reversed:
        sig_ref[...] = 1.0 - 2.0 * frac
    else:
        sig_ref[...] = 2.0 * frac - 1.0

    # Mod-1-reduced carry for the next T block (= frac at this block's last sample).
    last = frac[-1:, -1:]                                       # (1, 1)
    carry_ref[...] = last

    # Final phase: written once, on the last T block only, as a lane-dense slab.
    @pl.when(t == pl.num_programs(1) - 1)
    def _():
        two_pi = 2.0 * math.pi
        if is_reversed:
            val = two_pi - two_pi * last
        else:
            val = two_pi * last
        fin_ref[...] = jnp.zeros((8, _LANE), jnp.float32) + val


def sawtooth_generator(f0, initial_phase=None, *, fs=16000, is_reversed=True,
                       block_rows=256):
    """f0: (B, T, 1) Hz; initial_phase: (B, 1, 1) or None.
    Returns (signal (B, T), final_phase (B, 1, 1)), matching the PyTorch module."""
    B, T, _ = f0.shape
    if initial_phase is None:
        initial_phase = jnp.zeros((B, 1, 1), dtype=jnp.float32)

    rows = -(-T // _LANE)                               # rows of 128 samples per batch
    sb = min(block_rows, max(8, -(-rows // 8) * 8))     # sublane rows per T block
    n_tb = -(-rows // sb)                               # T blocks per batch (scan length)
    rows_pad = n_tb * sb
    t_pad = rows_pad * _LANE

    f0_2d = f0.reshape(B, T).astype(jnp.float32)
    if t_pad != T:
        # Zero padding leaves the cumulative phase (and hence the final phase) unchanged.
        f0_2d = jnp.pad(f0_2d, ((0, 0), (0, t_pad - T)))
    f0_rows = f0_2d.reshape(B * rows_pad, _LANE)
    ph0 = initial_phase.reshape(B).astype(jnp.float32)

    # Constant prefix-sum operators (DMA'd once; their block index never changes).
    lane = jnp.arange(_LANE, dtype=jnp.int32)
    triu = (lane[:, None] <= lane[None, :]).astype(jnp.float32)      # (128,128) inclusive
    row = jnp.arange(sb, dtype=jnp.int32)
    tril = (row[None, :] < row[:, None]).astype(jnp.float32)         # (sb,sb) strictly lower

    kernel = functools.partial(_sawtooth_kernel, inv_fs=float(1.0 / fs),
                               is_reversed=bool(is_reversed))

    signal2d, fin2d = pl.pallas_call(
        kernel,
        out_shape=(jax.ShapeDtypeStruct((B * rows_pad, _LANE), jnp.float32),
                   jax.ShapeDtypeStruct((B * 8, _LANE), jnp.float32)),
        grid=(B, n_tb),
        in_specs=[
            pl.BlockSpec(memory_space=pltpu.MemorySpace.SMEM),             # phase0 (B,)
            pl.BlockSpec((sb, _LANE), lambda b, t: (b * n_tb + t, 0)),     # f0 tile
            pl.BlockSpec((_LANE, _LANE), lambda b, t: (0, 0)),             # triu (resident)
            pl.BlockSpec((sb, sb), lambda b, t: (0, 0)),                   # tril (resident)
        ],
        out_specs=(
            pl.BlockSpec((sb, _LANE), lambda b, t: (b * n_tb + t, 0)),     # signal tile
            pl.BlockSpec((8, _LANE), lambda b, t: (b, 0)),                 # final-phase slab
        ),
        scratch_shapes=[pltpu.VMEM((1, 1), jnp.float32)],                  # carried phase
        compiler_params=pltpu.CompilerParams(
            dimension_semantics=("parallel", "arbitrary")),
    )(ph0, f0_rows, triu, tril)

    signal = signal2d.reshape(B, t_pad)[:, :T]
    final_phase = fin2d.reshape(B, 8 * _LANE)[:, :1].reshape(B, 1, 1)
    return signal, final_phase


def _reference(f0, initial_phase, fs, is_reversed):
    # TODO(synk): PyTorch does the cumsum in float64; TPU has no f64 vector path, so both the
    # kernel and this reference run in float32 (the kernel reduces its carry mod 1 per block).
    if initial_phase is None:
        initial_phase = jnp.zeros((f0.shape[0], 1, 1), dtype=jnp.float32)
    cum = jnp.cumsum(f0[:, :, 0].astype(jnp.float32) / fs, axis=1)
    phase = 2.0 * math.pi * ((cum + initial_phase[:, :, 0].astype(jnp.float32)) % 1.0)
    if is_reversed:
        phase = 2.0 * math.pi - phase
    signal = phase / math.pi - 1.0
    final_phase = phase[:, -1:].reshape(-1, 1, 1)
    return signal, final_phase


def _wrapped_max_err(a, b, period):
    d = jnp.abs(a - b)
    return float(jnp.max(jnp.minimum(d, period - d)))


if __name__ == "__main__":
    key = jax.random.PRNGKey(0)
    fs = 16000

    # Small test (single T block), with an explicit initial phase.
    B, T = 2, 16
    k1, k2 = jax.random.split(key)
    f0 = jax.random.uniform(k1, (B, T, 1), minval=80.0, maxval=800.0, dtype=jnp.float32)
    ph0 = jax.random.uniform(k2, (B, 1, 1), minval=0.0, maxval=1.0, dtype=jnp.float32)

    signal, final_phase = sawtooth_generator(f0, ph0, fs=fs, is_reversed=True)
    jax.block_until_ready((signal, final_phase))
    assert signal.shape == (B, T) and signal.dtype == jnp.float32
    assert final_phase.shape == (B, 1, 1) and final_phase.dtype == jnp.float32

    sig_ref, fin_ref = _reference(f0, ph0, fs, True)
    # Wrap-aware comparison (signal has period 2, phase has period 2*pi).
    assert _wrapped_max_err(signal, sig_ref, 2.0) < 1e-3
    assert _wrapped_max_err(final_phase, fin_ref, 2.0 * math.pi) < 1e-3

    # Same shapes with initial_phase=None (default-zero phase path).
    sig_n, fin_n = sawtooth_generator(f0, None, fs=fs, is_reversed=True)
    jax.block_until_ready((sig_n, fin_n))
    sig_nr, fin_nr = _reference(f0, None, fs, True)
    assert _wrapped_max_err(sig_n, sig_nr, 2.0) < 1e-3
    assert _wrapped_max_err(fin_n, fin_nr, 2.0 * math.pi) < 1e-3

    # Medium test exercising the mod-1 carried phase across multiple T blocks.
    B2, T2 = 2, 2000
    k3, k4 = jax.random.split(k2)
    f0b = jax.random.uniform(k3, (B2, T2, 1), minval=80.0, maxval=800.0, dtype=jnp.float32)
    ph0b = jax.random.uniform(k4, (B2, 1, 1), minval=0.0, maxval=1.0, dtype=jnp.float32)
    sig_b, fin_b = sawtooth_generator(f0b, ph0b, fs=fs, is_reversed=False, block_rows=8)
    jax.block_until_ready((sig_b, fin_b))
    sig_br, fin_br = _reference(f0b, ph0b, fs, False)
    assert _wrapped_max_err(sig_b, sig_br, 2.0) < 1e-3
    assert _wrapped_max_err(fin_b, fin_br, 2.0 * math.pi) < 1e-3

    print("KERNEL_OK")
</pallas_src>

<mosaic_0001>
module attributes {stable_mosaic.version = 11 : i64} {
  func.func @_sawtooth_kernel(%arg0: i32, %arg1: i32, %arg2: memref<2xf32, #tpu.memory_space<smem>>, %arg3: memref<8x128xf32, #tpu.memory_space<vmem>>, %arg4: memref<128x128xf32, #tpu.memory_space<vmem>>, %arg5: memref<8x8xf32, #tpu.memory_space<vmem>>, %arg6: memref<8x128xf32, #tpu.memory_space<vmem>>, %arg7: memref<8x128xf32, #tpu.memory_space<vmem>>, %arg8: memref<1x1xf32, #tpu.memory_space<vmem>>) attributes {dimension_semantics = [#tpu.dimension_semantics<parallel>, #tpu.dimension_semantics<arbitrary>], iteration_bounds = array<i64: 2, 1>, scalar_prefetch = 0 : i64, scratch_operands = 1 : i64, tpu.core_type = #tpu.core_type<tc>, window_params = [{transform_indices = @transform_0, window_bounds = array<i64: 2>}, {transform_indices = @transform_1, window_bounds = array<i64: 8, 128>}, {pipeline_mode = #tpu.pipeline_mode<synchronous>, transform_indices = @transform_2, window_bounds = array<i64: 128, 128>}, {pipeline_mode = #tpu.pipeline_mode<synchronous>, transform_indices = @transform_3, window_bounds = array<i64: 8, 8>}, {transform_indices = @transform_4, window_bounds = array<i64: 8, 128>}, {transform_indices = @transform_5, window_bounds = array<i64: 8, 128>}]} {
    %c0_i32 = arith.constant 0 : i32
    %0 = arith.cmpi eq, %arg1, %c0_i32 : i32
    %1 = arith.extui %0 : i1 to i32
    %c0_i32_0 = arith.constant 0 : i32
    %2 = arith.cmpi ne, %1, %c0_i32_0 : i32
    scf.if %2 {
      %cst_19 = arith.constant 0.000000e+00 : f32
      %29 = vector.broadcast %cst_19 : f32 to vector<1x1xf32>
      %30 = arith.index_cast %arg0 : i32 to index
      %31 = memref.load %arg2[%30] : memref<2xf32, #tpu.memory_space<smem>>
      %32 = vector.broadcast %31 : f32 to vector<1x1xf32>
      %33 = arith.addf %29, %32 : vector<1x1xf32>
      %c0_20 = arith.constant 0 : index
      %c0_21 = arith.constant 0 : index
      %34 = vector.load %arg8[%c0_20, %c0_21] : memref<1x1xf32, #tpu.memory_space<vmem>>, vector<1x1xf32>
      tpu.vector_store %arg8[%c0_20, %c0_21], %33 {strides = array<i32>} : memref<1x1xf32, #tpu.memory_space<vmem>>, vector<1x1xf32>,
    } else {
    }
    %c0 = arith.constant 0 : index
    %c0_1 = arith.constant 0 : index
    %3 = vector.load %arg3[%c0, %c0_1] : memref<8x128xf32, #tpu.memory_space<vmem>>, vector<8x128xf32>
    %cst = arith.constant 6.250000e-05 : f32
    %4 = vector.broadcast %cst : f32 to vector<8x128xf32>
    %5 = arith.mulf %3, %4 : vector<8x128xf32>
    %c0_2 = arith.constant 0 : index
    %c0_3 = arith.constant 0 : index
    %6 = vector.load %arg4[%c0_2, %c0_3] : memref<128x128xf32, #tpu.memory_space<vmem>>, vector<128x128xf32>
    %cst_4 = arith.constant dense<0.000000e+00> : vector<8x128xf32>
    %7 = tpu.matmul %5, %6, %cst_4 {dimension_numbers = #tpu.dot_dimension_numbers<[1], [0], [0], [1], [0, 0, 1, 1], [], []>, precision = #tpu.contract_precision<fp32>} : vector<8x128xf32>, vector<128x128xf32>, vector<8x128xf32> -> vector<8x128xf32>
    %c0_5 = arith.constant 0 : index
    %c0_6 = arith.constant 0 : index
    %8 = vector.load %arg5[%c0_5, %c0_6] : memref<8x8xf32, #tpu.memory_space<vmem>>, vector<8x8xf32>
    %cst_7 = arith.constant dense<0.000000e+00> : vector<8x128xf32>
    %9 = tpu.matmul %8, %5, %cst_7 {dimension_numbers = #tpu.dot_dimension_numbers<[1], [0], [0], [1], [0, 0, 1, 1], [], []>, precision = #tpu.contract_precision<fp32>} : vector<8x8xf32>, vector<8x128xf32>, vector<8x128xf32> -> vector<8x128xf32>
    %cst_8 = arith.constant dense<0.000000e+00> : vector<8xf32>
    %10 = vector.multi_reduction <add>, %9, %cst_8 [1] : vector<8x128xf32> to vector<8xf32>
    %11 = vector.shape_cast %10 : vector<8xf32> to vector<8x1xf32>
    %12 = vector.broadcast %11 : vector<8x1xf32> to vector<8x128xf32>
    %13 = arith.addf %7, %12 : vector<8x128xf32>
    %c0_9 = arith.constant 0 : index
    %c0_10 = arith.constant 0 : index
    %14 = vector.load %arg8[%c0_9, %c0_10] : memref<1x1xf32, #tpu.memory_space<vmem>>, vector<1x1xf32>
    %15 = vector.broadcast %14 : vector<1x1xf32> to vector<8x128xf32>
    %16 = arith.addf %13, %15 : vector<8x128xf32>
    %17 = math.floor %16 : vector<8x128xf32>
    %18 = arith.subf %16, %17 : vector<8x128xf32>
    %cst_11 = arith.constant 2.000000e+00 : f32
    %19 = vector.broadcast %cst_11 : f32 to vector<8x128xf32>
    %20 = arith.mulf %19, %18 : vector<8x128xf32>
    %cst_12 = arith.constant 1.000000e+00 : f32
    %21 = vector.broadcast %cst_12 : f32 to vector<8x128xf32>
    %22 = arith.subf %21, %20 : vector<8x128xf32>
    %c0_13 = arith.constant 0 : index
    %c0_14 = arith.constant 0 : index
    %23 = vector.load %arg6[%c0_13, %c0_14] : memref<8x128xf32, #tpu.memory_space<vmem>>, vector<8x128xf32>
    tpu.vector_store %arg6[%c0_13, %c0_14], %22 {strides = array<i32>} : memref<8x128xf32, #tpu.memory_space<vmem>>, vector<8x128xf32>,
    %24 = vector.extract_strided_slice %18 {offsets = [7, 127], sizes = [1, 1], strides = [1, 1]} : vector<8x128xf32> to vector<1x1xf32>
    %c0_15 = arith.constant 0 : index
    %c0_16 = arith.constant 0 : index
    %25 = vector.load %arg8[%c0_15, %c0_16] : memref<1x1xf32, #tpu.memory_space<vmem>>, vector<1x1xf32>
    tpu.vector_store %arg8[%c0_15, %c0_16], %24 {strides = array<i32>} : memref<1x1xf32, #tpu.memory_space<vmem>>, vector<1x1xf32>,
    %c0_i32_17 = arith.constant 0 : i32
    %26 = arith.cmpi eq, %arg1, %c0_i32_17 : i32
    %27 = arith.extui %26 : i1 to i32
    %c0_i32_18 = arith.constant 0 : i32
    %28 = arith.cmpi ne, %27, %c0_i32_18 : i32
    scf.if %28 {
      %cst_19 = arith.constant 6.28318548 : f32
      %29 = vector.broadcast %cst_19 : f32 to vector<1x1xf32>
      %30 = arith.mulf %29, %24 : vector<1x1xf32>
      %cst_20 = arith.constant 6.28318548 : f32
      %31 = vector.broadcast %cst_20 : f32 to vector<1x1xf32>
      %32 = arith.subf %31, %30 : vector<1x1xf32>
      %cst_21 = arith.constant 0.000000e+00 : f32
      %33 = vector.broadcast %cst_21 : f32 to vector<8x128xf32>
      %34 = vector.broadcast %32 : vector<1x1xf32> to vector<8x128xf32>
      %35 = arith.addf %33, %34 : vector<8x128xf32>
      %c0_22 = arith.constant 0 : index
      %c0_23 = arith.constant 0 : index
      %36 = vector.load %arg7[%c0_22, %c0_23] : memref<8x128xf32, #tpu.memory_space<vmem>>, vector<8x128xf32>
      tpu.vector_store %arg7[%c0_22, %c0_23], %35 {strides = array<i32>} : memref<8x128xf32, #tpu.memory_space<vmem>>, vector<8x128xf32>,
    } else {
    }
    return
  }
  func.func @transform_0(%arg0: i32, %arg1: i32) -> i32 {
    %c0_i32 = arith.constant 0 : i32
    %c0_i32_0 = arith.constant 0 : i32
    return %c0_i32 : i32
  }
  func.func @transform_1(%arg0: i32, %arg1: i32) -> (i32, i32) {
    %c1_i32 = arith.constant 1 : i32
    %0 = arith.muli %arg0, %c1_i32 : i32
    %1 = arith.addi %0, %arg1 : i32
    %c0_i32 = arith.constant 0 : i32
    %c0_i32_0 = arith.constant 0 : i32
    return %1, %c0_i32 : i32, i32
  }
  func.func @transform_2(%arg0: i32, %arg1: i32) -> (i32, i32) {
    %c0_i32 = arith.constant 0 : i32
    %c0_i32_0 = arith.constant 0 : i32
    %c0_i32_1 = arith.constant 0 : i32
    return %c0_i32, %c0_i32_0 : i32, i32
  }
  func.func @transform_3(%arg0: i32, %arg1: i32) -> (i32, i32) {
    %c0_i32 = arith.constant 0 : i32
    %c0_i32_0 = arith.constant 0 : i32
    %c0_i32_1 = arith.constant 0 : i32
    return %c0_i32, %c0_i32_0 : i32, i32
  }
  func.func @transform_4(%arg0: i32, %arg1: i32) -> (i32, i32) {
    %c1_i32 = arith.constant 1 : i32
    %0 = arith.muli %arg0, %c1_i32 : i32
    %1 = arith.addi %0, %arg1 : i32
    %c0_i32 = arith.constant 0 : i32
    %c0_i32_0 = arith.constant 0 : i32
    return %1, %c0_i32 : i32, i32
  }
  func.func @transform_5(%arg0: i32, %arg1: i32) -> (i32, i32) {
    %c0_i32 = arith.constant 0 : i32
    %c0_i32_0 = arith.constant 0 : i32
    return %arg0, %c0_i32 : i32, i32
  }
}

</mosaic_0001>

<llo_original>
// kernel: tpu_custom_call.1
$region0: #{tpu_custom_call.1}
  #allocation0 [shape = 'u32[]', space=smem, size = 0x4, offset = 0x4, fixed_abs, tag = 'smem constant byte address 0x4 - core index']
  #allocation1 [shape = 'u32[144,128]{1,0:T(1,128)}', space=vmem, size = 0x12000, scoped, tag = 'internal scratch']
  #allocation2 [shape = 'f32[1,1]{1,0:T(1,128)}', space=vmem, size = 0x200, scoped, tag = 'scratch operand']
  %s0 = inlined_call_operand.hbm [shape: f32[2], index: 0, kind: input, shape index: {}]
  %s1 = inlined_call_operand.hbm [shape: f32[16,128], index: 1, kind: input, shape index: {}]
  %s2 = inlined_call_operand.hbm [shape: f32[128,128], index: 2, kind: input, shape index: {}]
  %s3 = inlined_call_operand.hbm [shape: f32[8,8], index: 3, kind: input, shape index: {}]
  %s4 = inlined_call_operand.hbm [shape: f32[16,128], index: 4, kind: output, shape index: {0}]
  %s5 = inlined_call_operand.hbm [shape: f32[16,128], index: 5, kind: output, shape index: {1}]
  %6 = xla_tuple %s4, %s5
  %s7 = sld [smem:[#allocation0]]
  $region81: #{tpu_custom_call.1} parent=0
    _
  %s9 = ssub.s32 1, %s7
  %s10 = scalar_select 0, %s9, %s7
  $region1: #{tpu_custom_call.1} parent=0
    #allocation3 [shape = 'u8[512]{0}', space=smem, size = 0x200, scoped, tag = 'input window, operand 0, single buffered']
    #allocation4 [shape = 's32[2]{0}', space=sflag, size = 0x8, scoped, tag = 'scoped memory for tpu_custom_call.1']
    #allocation5 [shape = 's32[2]{0}', space=sflag, size = 0x8, scoped, tag = 'scoped memory for tpu_custom_call.1']
    #allocation6 [shape = 's32[2]{0}', space=sflag, size = 0x8, scoped, tag = 'scoped memory for tpu_custom_call.1']
    #allocation7 [shape = 'u8[8192]{0}', space=vmem, size = 0x2000, scoped, tag = 'input window, operand 1']
    #allocation8 [shape = 'u8[65536]{0}', space=vmem, size = 0x10000, scoped, tag = 'input window, operand 2, single buffered']
    #allocation9 [shape = 's32[1]{0}', space=sflag, size = 0x4, scoped, tag = 'scoped memory for tpu_custom_call.1']
    #allocation10 [shape = 'u8[4096]{0}', space=vmem, size = 0x1000, scoped, tag = 'input window, operand 3, single buffered']
    #allocation11 [shape = 'u8[8192]{0}', space=vmem, size = 0x2000, scoped, tag = 'output window, operand 0']
    #allocation12 [shape = 'u8[8192]{0}', space=vmem, size = 0x2000, scoped, tag = 'output window, operand 1']
    #allocation13 [shape = 's32[2]{0}', space=sflag, size = 0x8, scoped, tag = 'scoped memory for tpu_custom_call.1']
    %11 = vsyncpa [#allocation6], 0
    %12 = vsyncpa [#allocation4], 0
    %s13 = scalar_lea.sflag [#allocation4], 1
    %14 = vsyncpa %s13, 0
    %15 = vsyncpa [#allocation9], 0
    %16 = vsyncpa [#allocation5], 0
    %s17 = scalar_lea.sflag [#allocation5], 1
    %18 = vsyncpa %s17, 0
    %19 = vsyncpa [#allocation13], 0
    %s20 = scalar_lea.sflag [#allocation13], 1
    %21 = vsyncpa %s20, 0
    loop: start=0, step=1, limit=4
    $region2: #{tpu_custom_call.1} parent=1 // loop_pre_header
      _
    $region3: #{tpu_custom_call.1} parent=1 // loop_header
      %s23 = sphi 0, %s27
      %p24 = scmp.ge.s32.totalorder %s23, 4
      %s30 = sphi 0, %s42
      %s31 = sphi 0, %s38
      %s32 = sphi 0, %s30
      %s33 = sphi 0, %s31
      %s34 = sphi 0, %s32
      %s35 = sphi 0, %s33
      %s43 = sphi 0, %s43
      %s45 = sphi 0, %s43
      %s46 = sphi 0, %s45
      %s60 = sphi 0, %s46
      %s68 = sphi 0, %s70
      %s71 = sphi 0, %s68
      %s72 = sphi 0, %s71
      %s88 = sphi 0, %s72
      %s92 = sphi 0, %s92
      %s94 = sphi 0, %s92
      %s95 = sphi 0, %s94
      %s109 = sphi 0, %s95
      %s113 = sphi 0, %s113
      %s115 = sphi 0, %s113
      %s116 = sphi 0, %s115
      %s130 = sphi 0, %s116
      %s138 = sphi 0, %s140
      %s141 = sphi 0, %s138
      %s142 = sphi 0, %s141
      %s158 = sphi 0, %s142
      %s164 = sphi 0, %s166
      %s167 = sphi 0, %s164
      %s168 = sphi 0, %s167
      %s184 = sphi 0, %s168
    $region4: #{tpu_custom_call.1} parent=1 // loop_header_branch
      %26 = sbr.rel (%p24) target = $region8
    $region5: #{tpu_custom_call.1} parent=1 // loop_body
      %s28 = ssub.s32 %s23, 1
      %s29 = ssub.s32 %s23, 2
      %s36 = sadd.s32 1, %s31
      %p37 = scmp.ge.s32.totalorder %s36, 1
      %s38 = scalar_select %p37, 0, %s36
      %s39 = sadd.s32 1, %s30
      %s40 = scalar_select %p37, %s39, %s30
      %p41 = scmp.ge.s32.totalorder %s40, 2
      %s42 = scalar_select %p41, 0, %s40
      %s44 = sadd.s32 %s43, 1
      %p47 = scmp.eq.s32.totalorder %s23, 1
      %p48 = scmp.ne.s32.totalorder %s43, %s45
      %p49 = scmp.eq.s32.totalorder %s23, 0
      %p50 = por %p48, %p49
      %p51 = scmp.ne.s32.totalorder %s43, %s45
      %p52 = scmp.eq.s32.totalorder %s28, 1
      %p53 = por %p51, %p52
      %p54 = scmp.ne.s32.totalorder %s45, %s46
      %p55 = scmp.eq.s32.totalorder %s28, 0
      %p56 = por %p54, %p55
      %p57 = scmp.ne.s32.totalorder %s45, %s46
      %p58 = scmp.eq.s32.totalorder %s29, 1
      %p59 = por %p57, %p58
      %p61 = scmp.ne.s32.totalorder %s46, %s60
      %p62 = scmp.eq.s32.totalorder %s29, 0
      %p63 = por %p61, %p62
      %s64 = sadd.s32 %s30, %s31
      %s65 = sadd.s32 %s42, %s38
      %s66 = ssub.s32 %s64, %s65
      %p67 = scmp.eq.s32.totalorder %s66, 0
      %s69 = sadd.s32 %s68, 1
      %s70 = scalar_select %p67, %s68, %s69
      %p73 = pneg %p67
      %p74 = scmp.eq.s32.totalorder %s23, 1
      %p75 = por %p73, %p74
      %p76 = scmp.ne.s32.totalorder %s68, %s71
      %p77 = scmp.eq.s32.totalorder %s23, 0
      %p78 = por %p76, %p77
      %p79 = scmp.ne.s32.totalorder %s68, %s71
      %p80 = scmp.eq.s32.totalorder %s28, 1
      %p81 = por %p79, %p80
      %p82 = scmp.ne.s32.totalorder %s71, %s72
      %p83 = scmp.eq.s32.totalorder %s28, 0
      %p84 = por %p82, %p83
      %p85 = scmp.ne.s32.totalorder %s71, %s72
      %p86 = scmp.eq.s32.totalorder %s29, 1
      %p87 = por %p85, %p86
      %p89 = scmp.ne.s32.totalorder %s72, %s88
      %p90 = scmp.eq.s32.totalorder %s29, 0
      %p91 = por %p89, %p90
      %s93 = sadd.s32 %s92, 1
      %p96 = scmp.eq.s32.totalorder %s23, 1
      %p97 = scmp.ne.s32.totalorder %s92, %s94
      %p98 = scmp.eq.s32.totalorder %s23, 0
      %p99 = por %p97, %p98
      %p100 = scmp.ne.s32.totalorder %s92, %s94
      %p101 = scmp.eq.s32.totalorder %s28, 1
      %p102 = por %p100, %p101
      %p103 = scmp.ne.s32.totalorder %s94, %s95
      %p104 = scmp.eq.s32.totalorder %s28, 0
      %p105 = por %p103, %p104
      %p106 = scmp.ne.s32.totalorder %s94, %s95
      %p107 = scmp.eq.s32.totalorder %s29, 1
      %p108 = por %p106, %p107
      %p110 = scmp.ne.s32.totalorder %s95, %s109
      %p111 = scmp.eq.s32.totalorder %s29, 0
      %p112 = por %p110, %p111
      %s114 = sadd.s32 %s113, 1
      %p117 = scmp.eq.s32.totalorder %s23, 1
      %p118 = scmp.ne.s32.totalorder %s113, %s115
      %p119 = scmp.eq.s32.totalorder %s23, 0
      %p120 = por %p118, %p119
      %p121 = scmp.ne.s32.totalorder %s113, %s115
      %p122 = scmp.eq.s32.totalorder %s28, 1
      %p123 = por %p121, %p122
      %p124 = scmp.ne.s32.totalorder %s115, %s116
      %p125 = scmp.eq.s32.totalorder %s28, 0
      %p126 = por %p124, %p125
      %p127 = scmp.ne.s32.totalorder %s115, %s116
      %p128 = scmp.eq.s32.totalorder %s29, 1
      %p129 = por %p127, %p128
      %p131 = scmp.ne.s32.totalorder %s116, %s130
      %p132 = scmp.eq.s32.totalorder %s29, 0
      %p133 = por %p131, %p132
      %s134 = sadd.s32 %s30, %s31
      %s135 = sadd.s32 %s42, %s38
      %s136 = ssub.s32 %s134, %s135
      %p137 = scmp.eq.s32.totalorder %s136, 0
      %s139 = sadd.s32 %s138, 1
      %s140 = scalar_select %p137, %s138, %s139
      %p143 = pneg %p137
      %p144 = scmp.eq.s32.totalorder %s23, 1
      %p145 = por %p143, %p144
      %p146 = scmp.ne.s32.totalorder %s138, %s141
      %p147 = scmp.eq.s32.totalorder %s23, 0
      %p148 = por %p146, %p147
      %p149 = scmp.ne.s32.totalorder %s138, %s141
      %p150 = scmp.eq.s32.totalorder %s28, 1
      %p151 = por %p149, %p150
      %p152 = scmp.ne.s32.totalorder %s141, %s142
      %p153 = scmp.eq.s32.totalorder %s28, 0
      %p154 = por %p152, %p153
      %p155 = scmp.ne.s32.totalorder %s141, %s142
      %p156 = scmp.eq.s32.totalorder %s29, 1
      %p157 = por %p155, %p156
      %p159 = scmp.ne.s32.totalorder %s142, %s158
      %p160 = scmp.eq.s32.totalorder %s29, 0
      %p161 = por %p159, %p160
      %s162 = ssub.s32 %s30, %s42
      %p163 = scmp.eq.s32.totalorder %s162, 0
      %s165 = sadd.s32 %s164, 1
      %s166 = scalar_select %p163, %s164, %s165
      %p169 = pneg %p163
      %p170 = scmp.eq.s32.totalorder %s23, 1
      %p171 = por %p169, %p170
      %p172 = scmp.ne.s32.totalorder %s164, %s167
      %p173 = scmp.eq.s32.totalorder %s23, 0
      %p174 = por %p172, %p173
      %p175 = scmp.ne.s32.totalorder %s164, %s167
      %p176 = scmp.eq.s32.totalorder %s28, 1
      %p177 = por %p175, %p176
      %p178 = scmp.ne.s32.totalorder %s167, %s168
      %p179 = scmp.eq.s32.totalorder %s28, 0
      %p180 = por %p178, %p179
      %p181 = scmp.ne.s32.totalorder %s167, %s168
      %p182 = scmp.eq.s32.totalorder %s29, 1
      %p183 = por %p181, %p182
      %p185 = scmp.ne.s32.totalorder %s168, %s184
      %p186 = scmp.eq.s32.totalorder %s29, 0
      %p187 = por %p185, %p186
      %p188 = scmp.le.s32.totalorder 1, %s23
      %p189 = scmp.lt.s32.totalorder %s23, 3
      %p190 = pnand %p188, %p189
      %p191 = pneg %p190
      // Predicated region
      $region9: #{tpu_custom_call.1} parent=5 // pred_check
        _
      $region10: #{tpu_custom_call.1} parent=5 // pred_check_branch
        %193 = sbr.rel (%p190) target = $region12
      $region11: #{tpu_custom_call.1} parent=5 // pred_region
        %s194 = ssub.s32 %s23, 1
        // Predicated region
        $region13: #{tpu_custom_call.1} parent=11 // pred_check
          %p195 = pneg %p56
        $region14: #{tpu_custom_call.1} parent=11 // pred_check_branch
          %197 = sbr.rel (%p195) target = $region16
        $region15: #{tpu_custom_call.1} parent=11 // pred_region
          %s199 = ssub.s32 16, 16
          %200 = vsyncadd [#allocation6], %s199
          %203 = dma.hbm_to_smem %s0, 16, [#allocation3], [#allocation6]
        $region16: #{tpu_custom_call.1} parent=11 // pred_fallthru
          _
        // Predicated region
        $region17: #{tpu_custom_call.1} parent=11 // pred_check
          %p204 = pneg %p105
        $region18: #{tpu_custom_call.1} parent=11 // pred_check_branch
          %206 = sbr.rel (%p204) target = $region20
        $region19: #{tpu_custom_call.1} parent=11 // pred_region
          %s208 = ssub.s32 2048, 2048
          %209 = vsyncadd [#allocation9], %s208
          %s210 = sshll.u32 [#allocation8], 4
          %s211 = int_to_ptr.vmem [resolvable:$true] %s210
          %216 = dma.hbm_to_vmem [thread:$0]  %s2, 2048, %s211, [#allocation9], 128, 128, 8
        $region20: #{tpu_custom_call.1} parent=11 // pred_fallthru
          _
        // Predicated region
        $region21: #{tpu_custom_call.1} parent=11 // pred_check
          %p217 = pneg %p126
        $region22: #{tpu_custom_call.1} parent=11 // pred_check_branch
          %219 = sbr.rel (%p217) target = $region24
        $region23: #{tpu_custom_call.1} parent=11 // pred_region
          %s221 = ssub.s32 128, 128
          %222 = vsyncadd [#allocation9], %s221
          %s224 = sshll.u32 [#allocation10], 4
          %s225 = int_to_ptr.vmem [resolvable:$true] %s224
          %227 = dma.hbm_to_vmem [thread:$0]  %s3, 128, %s225, [#allocation9]
        $region24: #{tpu_custom_call.1} parent=11 // pred_fallthru
          _
      $region12: #{tpu_custom_call.1} parent=5 // pred_fallthru
        _
      %p228 = scmp.lt.s32.totalorder %s23, 2
      // Predicated region
      $region25: #{tpu_custom_call.1} parent=5 // pred_check
        %p229 = pneg %p228
      $region26: #{tpu_custom_call.1} parent=5 // pred_check_branch
        %231 = sbr.rel (%p229) target = $region28
      $region27: #{tpu_custom_call.1} parent=5 // pred_region
        // Predicated region
        $region29: #{tpu_custom_call.1} parent=27 // pred_check
          %p232 = pneg %p78
        $region30: #{tpu_custom_call.1} parent=27 // pred_check_branch
          %234 = sbr.rel (%p232) target = $region32
        $region31: #{tpu_custom_call.1} parent=27 // pred_region
          %s235 = sand.u32 %s68, 1
          %s236 = scalar_lea.sflag [#allocation4], %s235
          %s237 = sand.u32 %s68, 1
          %s238 = smul.addr %s237, 8
          %s239 = scalar_lea.vmem [#allocation7], %s238
          %s240 = sadd.s32 %s30, %s31
          %s242 = ssub.s32 128, 128
          %243 = vsyncadd %s236, %s242
          %s244 = smul.addr %s240, 128
          %s245 = scalar_lea.hbm %s1, %s244
          %s247 = sshll.u32 %s239, 4
          %s248 = int_to_ptr.vmem [resolvable:$true] %s247
          %250 = dma.hbm_to_vmem [thread:$0]  %s245, 128, %s248, %s236
        $region32: #{tpu_custom_call.1} parent=27 // pred_fallthru
          _
      $region28: #{tpu_custom_call.1} parent=5 // pred_fallthru
        _
      %p251 = scmp.le.s32.totalorder 1, %s23
      %p252 = scmp.lt.s32.totalorder %s23, 3
      %p253 = pnand %p251, %p252
      %p254 = pneg %p253
      // Predicated region
      $region33: #{tpu_custom_call.1} parent=5 // pred_check
        _
      $region34: #{tpu_custom_call.1} parent=5 // pred_check_branch
        %256 = sbr.rel (%p253) target = $region36
      $region35: #{tpu_custom_call.1} parent=5 // pred_region
        %s257 = ssub.s32 %s23, 1
        // Predicated region
        $region37: #{tpu_custom_call.1} parent=35 // pred_check
          %p258 = pneg %p56
        $region38: #{tpu_custom_call.1} parent=35 // pred_check_branch
          %260 = sbr.rel (%p258) target = $region40
        $region39: #{tpu_custom_call.1} parent=35 // pred_region
          %261 = dma.done [#allocation6], 16
        $region40: #{tpu_custom_call.1} parent=35 // pred_fallthru
          _
        %s262 = sand.u32 %s71, 1
        %s263 = scalar_lea.sflag [#allocation4], %s262
        %s264 = sand.u32 %s71, 1
        %s265 = smul.addr %s264, 8
        %s266 = scalar_lea.vmem [#allocation7], %s265
        // Predicated region
        $region41: #{tpu_custom_call.1} parent=35 // pred_check
          %p267 = pneg %p84
        $region42: #{tpu_custom_call.1} parent=35 // pred_check_branch
          %269 = sbr.rel (%p267) target = $region44
        $region43: #{tpu_custom_call.1} parent=35 // pred_region
          %270 = dma.done %s263, 128
        $region44: #{tpu_custom_call.1} parent=35 // pred_fallthru
          _
        // Predicated region
        $region45: #{tpu_custom_call.1} parent=35 // pred_check
          %p271 = pneg %p105
        $region46: #{tpu_custom_call.1} parent=35 // pred_check_branch
          %273 = sbr.rel (%p271) target = $region48
        $region47: #{tpu_custom_call.1} parent=35 // pred_region
          %274 = dma.done [#allocation9], 2048
        $region48: #{tpu_custom_call.1} parent=35 // pred_fallthru
          _
        // Predicated region
        $region49: #{tpu_custom_call.1} parent=35 // pred_check
          %p275 = pneg %p126
        $region50: #{tpu_custom_call.1} parent=35 // pred_check_branch
          %277 = sbr.rel (%p275) target = $region52
        $region51: #{tpu_custom_call.1} parent=35 // pred_region
          %278 = dma.done [#allocation9], 128
        $region52: #{tpu_custom_call.1} parent=35 // pred_fallthru
          _
        %279 = sfence
        %p280 = pneg %p56
        %p281 = pneg %p53
        %s282 = sand.u32 %s71, 1
        %s283 = scalar_lea.sflag [#allocation4], %s282
        %s284 = sand.u32 %s71, 1
        %s285 = smul.addr %s284, 8
        %s286 = scalar_lea.vmem [#allocation7], %s285
        %p287 = pneg %p84
        %p288 = pneg %p81
        %p289 = pneg %p105
        %p290 = pneg %p102
        %p291 = pneg %p126
        %p292 = pneg %p123
        %p293 = pneg %p154
        %p294 = pneg %p151
        %s295 = sand.u32 %s141, 1
        %s296 = scalar_lea.sflag [#allocation5], %s295
        %s297 = sand.u32 %s141, 1
        %s298 = smul.addr %s297, 8
        %s299 = scalar_lea.vmem [#allocation11], %s298
        %p300 = pneg %p180
        %p301 = pneg %p177
        %s302 = sand.u32 %s167, 1
        %s303 = scalar_lea.sflag [#allocation13], %s302
        %s304 = sand.u32 %s167, 1
        %s305 = smul.addr %s304, 8
        %s306 = scalar_lea.vmem [#allocation12], %s305
        %s307 = sadd.s32 %s32, %s33
        %s308 = sadd.s32 %s32, %s33
        %p309 = scmp.eq.s32.totalorder %s33, 0
        // Predicated region
        $region53: #{tpu_custom_call.1} parent=35 // pred_check
          %p310 = pneg %p309
        $region54: #{tpu_custom_call.1} parent=35 // pred_check_branch
          %312 = sbr.rel (%p310) target = $region56
        $region55: #{tpu_custom_call.1} parent=35 // pred_region
          %s313 = sld [smem:[#allocation3 + %s32]]
          %v314 = vstv %s313
          %v315 = vadd.f32 %v314, 0.0
          %vm316 = vcmask 0
          %317 = vst.msk [vmem:[#allocation2] sm:$0x1] %vm316, %v315
        $region56: #{tpu_custom_call.1} parent=35 // pred_fallthru
          _
        %v318 = vld [vmem:[%s266] sm:$0xff]
        %v319 = vmul.f32 %v318, 6.25e-05
        %v320 = vld [vmem:[#allocation8] sm:$0xff]
        %v321 = vld [vmem:[#allocation8 + $0x8] sm:$0xff]
        %v322 = vld [vmem:[#allocation8 + $0x10] sm:$0xff]
        %v323 = vld [vmem:[#allocation8 + $0x18] sm:$0xff]
        %v324 = vld [vmem:[#allocation8 + $0x20] sm:$0xff]
        %v325 = vld [vmem:[#allocation8 + $0x28] sm:$0xff]
        %v326 = vld [vmem:[#allocation8 + $0x30] sm:$0xff]
        %v327 = vld [vmem:[#allocation8 + $0x38] sm:$0xff]
        %v328 = vld [vmem:[#allocation8 + $0x40] sm:$0xff]
        %v329 = vld [vmem:[#allocation8 + $0x48] sm:$0xff]
        %v330 = vld [vmem:[#allocation8 + $0x50] sm:$0xff]
        %v331 = vld [vmem:[#allocation8 + $0x58] sm:$0xff]
        %v332 = vld [vmem:[#allocation8 + $0x60] sm:$0xff]
        %v333 = vld [vmem:[#allocation8 + $0x68] sm:$0xff]
        %v334 = vld [vmem:[#allocation8 + $0x70] sm:$0xff]
        %v335 = vld [vmem:[#allocation8 + $0x78] sm:$0xff]
        %v336 = vld [vmem:[#allocation10] sm:$0xff]
        %vm337 = vcmask 64512
        %v339 = vsel %vm337, %v336, 0
        %341 = vmatprep.subr.mxu0 0.0
        %342 = vmatpush1.msra.mxu0 0.0
        %343 = vmatprep.subr.mxu0 0.0
        %344 = vmatpush1.msra.mxu0 0.0
        %345 = vmatprep.subr.mxu0 0.0
        %346 = vmatpush1.msra.mxu0 0.0
        %347 = vmatprep.subr.mxu0 0.0
        %348 = vmatpush1.msra.mxu0 0.0
        %349 = vmatprep.subr.mxu0 0.0
        %350 = vmatpush1.msra.mxu0 0.0
        %351 = vmatprep.subr.mxu0 0.0
        %352 = vmatpush1.msra.mxu0 0.0
        %353 = vmatprep.subr.mxu0 0.0
        %354 = vmatpush1.msra.mxu0 0.0
        %355 = vmatprep.subr.mxu0 0.0
        %356 = vmatpush1.msra.mxu0 0.0
        %357 = vmatprep.subr.mxu0 0.0
        %358 = vmatpush1.msra.mxu0 0.0
        %359 = vmatprep.subr.mxu0 0.0
        %360 = vmatpush1.msra.mxu0 0.0
        %361 = vmatprep.subr.mxu0 0.0
        %362 = vmatpush1.msra.mxu0 0.0
        %363 = vmatprep.subr.mxu0 0.0
        %364 = vmatpush1.msra.mxu0 0.0
        %365 = vmatprep.subr.mxu0 0.0
        %366 = vmatpush1.msra.mxu0 0.0
        %367 = vmatprep.subr.mxu0 0.0
        %368 = vmatpush1.msra.mxu0 0.0
        %369 = vmatprep.subr.mxu0 0.0
        %370 = vmatpush1.msra.mxu0 0.0
        %371 = vmatprep.subr.mxu0 0.0
        %v372 = vand.u32 %v319, 4294901760
        %373 = vmatpush1.msra.mxu0 %v372
        %374 = vmatprep.subr.mxu0 0.0
        %375 = vmatpush2.msra.mxu0 0.0
        %376 = vmatprep.subr.mxu0 0.0
        %377 = vmatpush2.msra.mxu0 0.0
        %378 = vmatprep.subr.mxu0 0.0
        %379 = vmatpush2.msra.mxu0 0.0
        %380 = vmatprep.subr.mxu0 0.0
        %381 = vmatpush2.msra.mxu0 0.0
        %382 = vmatprep.subr.mxu0 0.0
        %383 = vmatpush2.msra.mxu0 0.0
        %384 = vmatprep.subr.mxu0 0.0
        %385 = vmatpush2.msra.mxu0 0.0
        %386 = vmatprep.subr.mxu0 0.0
        %387 = vmatpush2.msra.mxu0 0.0
        %388 = vmatprep.subr.mxu0 0.0
        %389 = vmatpush2.msra.mxu0 0.0
        %390 = vmatprep.subr.mxu0 0.0
        %391 = vmatpush2.msra.mxu0 0.0
        %392 = vmatprep.subr.mxu0 0.0
        %393 = vmatpush2.msra.mxu0 0.0
        %394 = vmatprep.subr.mxu0 0.0
        %395 = vmatpush2.msra.mxu0 0.0
        %396 = vmatprep.subr.mxu0 0.0
        %397 = vmatpush2.msra.mxu0 0.0
        %398 = vmatprep.subr.mxu0 0.0
        %399 = vmatpush2.msra.mxu0 0.0
        %400 = vmatprep.subr.mxu0 0.0
        %401 = vmatpush2.msra.mxu0 0.0
        %402 = vmatprep.subr.mxu0 0.0
        %403 = vmatpush2.msra.mxu0 0.0
        %404 = vmatprep.subr.mxu0 0.0
        %405 = vmatpush2.msra.mxu0 0.0
        %406 = vmatprep.mubr.f32.mxu0 0.0
        %v407 = vand.u32 %v339, 4294901760
        %v408 = vsub.f32 %v339, %v407
        %v409 = vand.u32 %v408, 4294901760
        %v410 = vsub.f32 %v408, %v409
        %v411 = vand.u32 %v410, 4294901760
        %412 = vmatmul.mubr.f32.gmra.mxu0 %v411
        %v413 = vpop.f32.mrf.mxu0
        %v414 = vadd.f32 0.0, %v413
        %v415 = vpop.f32.mrf.mxu0
        %416 = vdwg.mxu0
        %417 = vmatprep.subr.mxu0 0.0
        %418 = vmatpush1.msra.mxu0 0.0
        %419 = vmatprep.subr.mxu0 0.0
        %420 = vmatpush1.msra.mxu0 0.0
        %421 = vmatprep.subr.mxu0 0.0
        %422 = vmatpush1.msra.mxu0 0.0
        %423 = vmatprep.subr.mxu0 0.0
        %424 = vmatpush1.msra.mxu0 0.0
        %425 = vmatprep.subr.mxu0 0.0
        %426 = vmatpush1.msra.mxu0 0.0
        %427 = vmatprep.subr.mxu0 0.0
        %428 = vmatpush1.msra.mxu0 0.0
        %429 = vmatprep.subr.mxu0 0.0
        %430 = vmatpush1.msra.mxu0 0.0
        %431 = vmatprep.subr.mxu0 0.0
        %432 = vmatpush1.msra.mxu0 0.0
        %433 = vmatprep.subr.mxu0 0.0
        %434 = vmatpush1.msra.mxu0 0.0
        %435 = vmatprep.subr.mxu0 0.0
        %436 = vmatpush1.msra.mxu0 0.0
        %437 = vmatprep.subr.mxu0 0.0
        %438 = vmatpush1.msra.mxu0 0.0
        %439 = vmatprep.subr.mxu0 0.0
        %440 = vmatpush1.msra.mxu0 0.0
        %441 = vmatprep.subr.mxu0 0.0
        %442 = vmatpush1.msra.mxu0 0.0
        %443 = vmatprep.subr.mxu0 0.0
        %444 = vmatpush1.msra.mxu0 0.0
        %445 = vmatprep.subr.mxu0 0.0
        %446 = vmatpush1.msra.mxu0 0.0
        %447 = vmatprep.subr.mxu0 0.0
        %v448 = vand.u32 %v319, 4294901760
        %v449 = vsub.f32 %v319, %v448
        %v450 = vand.u32 %v449, 4294901760
        %v451 = vsub.f32 %v449, %v450
        %v452 = vand.u32 %v451, 4294901760
        %453 = vmatpush1.msra.mxu0 %v452
        %454 = vmatprep.subr.mxu0 0.0
        %455 = vmatpush2.msra.mxu0 0.0
        %456 = vmatprep.subr.mxu0 0.0
        %457 = vmatpush2.msra.mxu0 0.0
        %458 = vmatprep.subr.mxu0 0.0
        %459 = vmatpush2.msra.mxu0 0.0
        %460 = vmatprep.subr.mxu0 0.0
        %461 = vmatpush2.msra.mxu0 0.0
        %462 = vmatprep.subr.mxu0 0.0
        %463 = vmatpush2.msra.mxu0 0.0
        %464 = vmatprep.subr.mxu0 0.0
        %465 = vmatpush2.msra.mxu0 0.0
        %466 = vmatprep.subr.mxu0 0.0
        %467 = vmatpush2.msra.mxu0 0.0
        %468 = vmatprep.subr.mxu0 0.0
        %469 = vmatpush2.msra.mxu0 0.0
        %470 = vmatprep.subr.mxu0 0.0
        %471 = vmatpush2.msra.mxu0 0.0
        %472 = vmatprep.subr.mxu0 0.0
        %473 = vmatpush2.msra.mxu0 0.0
        %474 = vmatprep.subr.mxu0 0.0
        %475 = vmatpush2.msra.mxu0 0.0
        %476 = vmatprep.subr.mxu0 0.0
        %477 = vmatpush2.msra.mxu0 0.0
        %478 = vmatprep.subr.mxu0 0.0
        %479 = vmatpush2.msra.mxu0 0.0
        %480 = vmatprep.subr.mxu0 0.0
        %481 = vmatpush2.msra.mxu0 0.0
        %482 = vmatprep.subr.mxu0 0.0
        %483 = vmatpush2.msra.mxu0 0.0
        %484 = vmatprep.subr.mxu0 0.0
        %485 = vmatpush2.msra.mxu0 0.0
        %486 = vmatprep.mubr.f32.mxu0 0.0
        %v487 = vand.u32 %v339, 4294901760
        %488 = vmatmul.mubr.f32.gmra.mxu0 %v487
        %v489 = vpop.f32.mrf.mxu0
        %v490 = vadd.f32 %v414, %v489
        %v491 = vpop.f32.mrf.mxu0
        %492 = vdwg.mxu0
        %493 = vmatprep.subr.mxu0 0.0
        %494 = vmatpush1.msra.mxu0 0.0
        %495 = vmatprep.subr.mxu0 0.0
        %496 = vmatpush1.msra.mxu0 0.0
        %497 = vmatprep.subr.mxu0 0.0
        %498 = vmatpush1.msra.mxu0 0.0
        %499 = vmatprep.subr.mxu0 0.0
        %500 = vmatpush1.msra.mxu0 0.0
        %501 = vmatprep.subr.mxu0 0.0
        %502 = vmatpush1.msra.mxu0 0.0
        %503 = vmatprep.subr.mxu0 0.0
        %504 = vmatpush1.msra.mxu0 0.0
        %505 = vmatprep.subr.mxu0 0.0
        %506 = vmatpush1.msra.mxu0 0.0
        %507 = vmatprep.subr.mxu0 0.0
        %508 = vmatpush1.msra.mxu0 0.0
        %509 = vmatprep.subr.mxu0 0.0
        %510 = vmatpush1.msra.mxu0 0.0
        %511 = vmatprep.subr.mxu0 0.0
        %512 = vmatpush1.msra.mxu0 0.0
        %513 = vmatprep.subr.mxu0 0.0
        %514 = vmatpush1.msra.mxu0 0.0
        %515 = vmatprep.subr.mxu0 0.0
        %516 = vmatpush1.msra.mxu0 0.0
        %517 = vmatprep.subr.mxu0 0.0
        %518 = vmatpush1.msra.mxu0 0.0
        %519 = vmatprep.subr.mxu0 0.0
        %520 = vmatpush1.msra.mxu0 0.0
        %521 = vmatprep.subr.mxu0 0.0
        %522 = vmatpush1.msra.mxu0 0.0
        %523 = vmatprep.subr.mxu0 0.0
        %v524 = vand.u32 %v319, 4294901760
        %v525 = vsub.f32 %v319, %v524
        %526 = vmatpush1.msra.mxu0 %v525
        %527 = vmatprep.subr.mxu0 0.0
        %528 = vmatpush2.msra.mxu0 0.0
        %529 = vmatprep.subr.mxu0 0.0
        %530 = vmatpush2.msra.mxu0 0.0
        %531 = vmatprep.subr.mxu0 0.0
        %532 = vmatpush2.msra.mxu0 0.0
        %533 = vmatprep.subr.mxu0 0.0
        %534 = vmatpush2.msra.mxu0 0.0
        %535 = vmatprep.subr.mxu0 0.0
        %536 = vmatpush2.msra.mxu0 0.0
        %537 = vmatprep.subr.mxu0 0.0
        %538 = vmatpush2.msra.mxu0 0.0
        %539 = vmatprep.subr.mxu0 0.0
        %540 = vmatpush2.msra.mxu0 0.0
        %541 = vmatprep.subr.mxu0 0.0
        %542 = vmatpush2.msra.mxu0 0.0
        %543 = vmatprep.subr.mxu0 0.0
        %544 = vmatpush2.msra.mxu0 0.0
        %545 = vmatprep.subr.mxu0 0.0
        %546 = vmatpush2.msra.mxu0 0.0
        %547 = vmatprep.subr.mxu0 0.0
        %548 = vmatpush2.msra.mxu0 0.0
        %549 = vmatprep.subr.mxu0 0.0
        %550 = vmatpush2.msra.mxu0 0.0
        %551 = vmatprep.subr.mxu0 0.0
        %552 = vmatpush2.msra.mxu0 0.0
        %553 = vmatprep.subr.mxu0 0.0
        %554 = vmatpush2.msra.mxu0 0.0
        %555 = vmatprep.subr.mxu0 0.0
        %556 = vmatpush2.msra.mxu0 0.0
        %557 = vmatprep.subr.mxu0 0.0
        %558 = vmatpush2.msra.mxu0 0.0
        %559 = vmatprep.mubr.f32.mxu0 0.0
        %v560 = vand.u32 %v339, 4294901760
        %v561 = vsub.f32 %v339, %v560
        %562 = vmatmul.mubr.f32.gmra.mxu0 %v561
        %v563 = vpop.f32.mrf.mxu0
        %v564 = vadd.f32 %v490, %v563
        %v565 = vpop.f32.mrf.mxu0
        %566 = vdwg.mxu0
        %567 = vmatprep.subr.mxu0 0.0
        %568 = vmatpush1.msra.mxu0 0.0
        %569 = vmatprep.subr.mxu0 0.0
        %570 = vmatpush1.msra.mxu0 0.0
        %571 = vmatprep.subr.mxu0 0.0
        %572 = vmatpush1.msra.mxu0 0.0
        %573 = vmatprep.subr.mxu0 0.0
        %574 = vmatpush1.msra.mxu0 0.0
        %575 = vmatprep.subr.mxu0 0.0
        %576 = vmatpush1.msra.mxu0 0.0
        %577 = vmatprep.subr.mxu0 0.0
        %578 = vmatpush1.msra.mxu0 0.0
        %579 = vmatprep.subr.mxu0 0.0
        %580 = vmatpush1.msra.mxu0 0.0
        %581 = vmatprep.subr.mxu0 0.0
        %582 = vmatpush1.msra.mxu0 0.0
        %583 = vmatprep.subr.mxu0 0.0
        %584 = vmatpush1.msra.mxu0 0.0
        %585 = vmatprep.subr.mxu0 0.0
        %586 = vmatpush1.msra.mxu0 0.0
        %587 = vmatprep.subr.mxu0 0.0
        %588 = vmatpush1.msra.mxu0 0.0
        %589 = vmatprep.subr.mxu0 0.0
        %590 = vmatpush1.msra.mxu0 0.0
        %591 = vmatprep.subr.mxu0 0.0
        %592 = vmatpush1.msra.mxu0 0.0
        %593 = vmatprep.subr.mxu0 0.0
        %594 = vmatpush1.msra.mxu0 0.0
        %595 = vmatprep.subr.mxu0 0.0
        %596 = vmatpush1.msra.mxu0 0.0
        %597 = vmatprep.subr.mxu0 0.0
        %v598 = vand.u32 %v319, 4294901760
        %599 = vmatpush1.msra.mxu0 %v598
        %600 = vmatprep.subr.mxu0 0.0
        %601 = vmatpush2.msra.mxu0 0.0
        %602 = vmatprep.subr.mxu0 0.0
        %603 = vmatpush2.msra.mxu0 0.0
        %604 = vmatprep.subr.mxu0 0.0
        %605 = vmatpush2.msra.mxu0 0.0
        %606 = vmatprep.subr.mxu0 0.0
        %607 = vmatpush2.msra.mxu0 0.0
        %608 = vmatprep.subr.mxu0 0.0
        %609 = vmatpush2.msra.mxu0 0.0
        %610 = vmatprep.subr.mxu0 0.0
        %611 = vmatpush2.msra.mxu0 0.0
        %612 = vmatprep.subr.mxu0 0.0
        %613 = vmatpush2.msra.mxu0 0.0
        %614 = vmatprep.subr.mxu0 0.0
        %615 = vmatpush2.msra.mxu0 0.0
        %616 = vmatprep.subr.mxu0 0.0
        %617 = vmatpush2.msra.mxu0 0.0
        %618 = vmatprep.subr.mxu0 0.0
        %619 = vmatpush2.msra.mxu0 0.0
        %620 = vmatprep.subr.mxu0 0.0
        %621 = vmatpush2.msra.mxu0 0.0
        %622 = vmatprep.subr.mxu0 0.0
        %623 = vmatpush2.msra.mxu0 0.0
        %624 = vmatprep.subr.mxu0 0.0
        %625 = vmatpush2.msra.mxu0 0.0
        %626 = vmatprep.subr.mxu0 0.0
        %627 = vmatpush2.msra.mxu0 0.0
        %628 = vmatprep.subr.mxu0 0.0
        %629 = vmatpush2.msra.mxu0 0.0
        %630 = vmatprep.subr.mxu0 0.0
        %631 = vmatpush2.msra.mxu0 0.0
        %632 = vmatprep.mubr.f32.mxu0 0.0
        %v633 = vand.u32 %v339, 4294901760
        %v634 = vsub.f32 %v339, %v633
        %v635 = vand.u32 %v634, 4294901760
        %636 = vmatmul.mubr.f32.gmra.mxu0 %v635
        %v637 = vpop.f32.mrf.mxu0
        %v638 = vadd.f32 %v564, %v637
        %v639 = vpop.f32.mrf.mxu0
        %640 = vdwg.mxu0
        %641 = vmatprep.subr.mxu0 0.0
        %642 = vmatpush1.msra.mxu0 0.0
        %643 = vmatprep.subr.mxu0 0.0
        %644 = vmatpush1.msra.mxu0 0.0
        %645 = vmatprep.subr.mxu0 0.0
        %646 = vmatpush1.msra.mxu0 0.0
        %647 = vmatprep.subr.mxu0 0.0
        %648 = vmatpush1.msra.mxu0 0.0
        %649 = vmatprep.subr.mxu0 0.0
        %650 = vmatpush1.msra.mxu0 0.0
        %651 = vmatprep.subr.mxu0 0.0
        %652 = vmatpush1.msra.mxu0 0.0
        %653 = vmatprep.subr.mxu0 0.0
        %654 = vmatpush1.msra.mxu0 0.0
        %655 = vmatprep.subr.mxu0 0.0
        %656 = vmatpush1.msra.mxu0 0.0
        %657 = vmatprep.subr.mxu0 0.0
        %658 = vmatpush1.msra.mxu0 0.0
        %659 = vmatprep.subr.mxu0 0.0
        %660 = vmatpush1.msra.mxu0 0.0
        %661 = vmatprep.subr.mxu0 0.0
        %662 = vmatpush1.msra.mxu0 0.0
        %663 = vmatprep.subr.mxu0 0.0
        %664 = vmatpush1.msra.mxu0 0.0
        %665 = vmatprep.subr.mxu0 0.0
        %666 = vmatpush1.msra.mxu0 0.0
        %667 = vmatprep.subr.mxu0 0.0
        %668 = vmatpush1.msra.mxu0 0.0
        %669 = vmatprep.subr.mxu0 0.0
        %670 = vmatpush1.msra.mxu0 0.0
        %671 = vmatprep.subr.mxu0 0.0
        %v672 = vand.u32 %v319, 4294901760
        %v673 = vsub.f32 %v319, %v672
        %v674 = vand.u32 %v673, 4294901760
        %675 = vmatpush1.msra.mxu0 %v674
        %676 = vmatprep.subr.mxu0 0.0
        %677 = vmatpush2.msra.mxu0 0.0
        %678 = vmatprep.subr.mxu0 0.0
        %679 = vmatpush2.msra.mxu0 0.0
        %680 = vmatprep.subr.mxu0 0.0
        %681 = vmatpush2.msra.mxu0 0.0
        %682 = vmatprep.subr.mxu0 0.0
        %683 = vmatpush2.msra.mxu0 0.0
        %684 = vmatprep.subr.mxu0 0.0
        %685 = vmatpush2.msra.mxu0 0.0
        %686 = vmatprep.subr.mxu0 0.0
        %687 = vmatpush2.msra.mxu0 0.0
        %688 = vmatprep.subr.mxu0 0.0
        %689 = vmatpush2.msra.mxu0 0.0
        %690 = vmatprep.subr.mxu0 0.0
        %691 = vmatpush2.msra.mxu0 0.0
        %692 = vmatprep.subr.mxu0 0.0
        %693 = vmatpush2.msra.mxu0 0.0
        %694 = vmatprep.subr.mxu0 0.0
        %695 = vmatpush2.msra.mxu0 0.0
        %696 = vmatprep.subr.mxu0 0.0
        %697 = vmatpush2.msra.mxu0 0.0
        %698 = vmatprep.subr.mxu0 0.0
        %699 = vmatpush2.msra.mxu0 0.0
        %700 = vmatprep.subr.mxu0 0.0
        %701 = vmatpush2.msra.mxu0 0.0
        %702 = vmatprep.subr.mxu0 0.0
        %703 = vmatpush2.msra.mxu0 0.0
        %704 = vmatprep.subr.mxu0 0.0
        %705 = vmatpush2.msra.mxu0 0.0
        %706 = vmatprep.subr.mxu0 0.0
        %707 = vmatpush2.msra.mxu0 0.0
        %708 = vmatprep.mubr.f32.mxu0 0.0
        %v709 = vand.u32 %v339, 4294901760
        %710 = vmatmul.mubr.f32.gmra.mxu0 %v709
        %v711 = vpop.f32.mrf.mxu0
        %v712 = vadd.f32 %v638, %v711
        %v713 = vpop.f32.mrf.mxu0
        %714 = vdwg.mxu0
        %715 = vmatprep.subr.mxu0 0.0
        %716 = vmatpush1.msra.mxu0 0.0
        %717 = vmatprep.subr.mxu0 0.0
        %718 = vmatpush1.msra.mxu0 0.0
        %719 = vmatprep.subr.mxu0 0.0
        %720 = vmatpush1.msra.mxu0 0.0
        %721 = vmatprep.subr.mxu0 0.0
        %722 = vmatpush1.msra.mxu0 0.0
        %723 = vmatprep.subr.mxu0 0.0
        %724 = vmatpush1.msra.mxu0 0.0
        %725 = vmatprep.subr.mxu0 0.0
        %726 = vmatpush1.msra.mxu0 0.0
        %727 = vmatprep.subr.mxu0 0.0
        %728 = vmatpush1.msra.mxu0 0.0
        %729 = vmatprep.subr.mxu0 0.0
        %730 = vmatpush1.msra.mxu0 0.0
        %731 = vmatprep.subr.mxu0 0.0
        %732 = vmatpush1.msra.mxu0 0.0
        %733 = vmatprep.subr.mxu0 0.0
        %734 = vmatpush1.msra.mxu0 0.0
        %735 = vmatprep.subr.mxu0 0.0
        %736 = vmatpush1.msra.mxu0 0.0
        %737 = vmatprep.subr.mxu0 0.0
        %738 = vmatpush1.msra.mxu0 0.0
        %739 = vmatprep.subr.mxu0 0.0
        %740 = vmatpush1.msra.mxu0 0.0
        %741 = vmatprep.subr.mxu0 0.0
        %742 = vmatpush1.msra.mxu0 0.0
        %743 = vmatprep.subr.mxu0 0.0
        %744 = vmatpush1.msra.mxu0 0.0
        %745 = vmatprep.subr.mxu0 0.0
        %v746 = vand.u32 %v319, 4294901760
        %747 = vmatpush1.msra.mxu0 %v746
        %748 = vmatprep.subr.mxu0 0.0
        %749 = vmatpush2.msra.mxu0 0.0
        %750 = vmatprep.subr.mxu0 0.0
        %751 = vmatpush2.msra.mxu0 0.0
        %752 = vmatprep.subr.mxu0 0.0
        %753 = vmatpush2.msra.mxu0 0.0
        %754 = vmatprep.subr.mxu0 0.0
        %755 = vmatpush2.msra.mxu0 0.0
        %756 = vmatprep.subr.mxu0 0.0
        %757 = vmatpush2.msra.mxu0 0.0
        %758 = vmatprep.subr.mxu0 0.0
        %759 = vmatpush2.msra.mxu0 0.0
        %760 = vmatprep.subr.mxu0 0.0
        %761 = vmatpush2.msra.mxu0 0.0
        %762 = vmatprep.subr.mxu0 0.0
        %763 = vmatpush2.msra.mxu0 0.0
        %764 = vmatprep.subr.mxu0 0.0
        %765 = vmatpush2.msra.mxu0 0.0
        %766 = vmatprep.subr.mxu0 0.0
        %767 = vmatpush2.msra.mxu0 0.0
        %768 = vmatprep.subr.mxu0 0.0
        %769 = vmatpush2.msra.mxu0 0.0
        %770 = vmatprep.subr.mxu0 0.0
        %771 = vmatpush2.msra.mxu0 0.0
        %772 = vmatprep.subr.mxu0 0.0
        %773 = vmatpush2.msra.mxu0 0.0
        %774 = vmatprep.subr.mxu0 0.0
        %775 = vmatpush2.msra.mxu0 0.0
        %776 = vmatprep.subr.mxu0 0.0
        %777 = vmatpush2.msra.mxu0 0.0
        %778 = vmatprep.subr.mxu0 0.0
        %779 = vmatpush2.msra.mxu0 0.0
        %780 = vmatprep.mubr.f32.mxu0 0.0
        %v781 = vand.u32 %v339, 4294901760
        %782 = vmatmul.mubr.f32.gmra.mxu0 %v781
        %v783 = vpop.f32.mrf.mxu0
        %v784 = vadd.f32 %v712, %v783
        %v785 = vpop.f32.mrf.mxu0
        %786 = vdwg.mxu0
        %787 = vadd.xlane.f32.xlu0 %v784
        %v788 = vpop.xlane.xlu0 %787
        %789 = vmatprep.subr.mxu0 0.0
        %v790 = vand.u32 %v335, 4294901760
        %791 = vmatpush1.msra.mxu0 %v790
        %792 = vmatprep.subr.mxu0 0.0
        %v793 = vand.u32 %v334, 4294901760
        %794 = vmatpush1.msra.mxu0 %v793
        %795 = vmatprep.subr.mxu0 0.0
        %v796 = vand.u32 %v333, 4294901760
        %797 = vmatpush1.msra.mxu0 %v796
        %798 = vmatprep.subr.mxu0 0.0
        %v799 = vand.u32 %v332, 4294901760
        %800 = vmatpush1.msra.mxu0 %v799
        %801 = vmatprep.subr.mxu0 0.0
        %v802 = vand.u32 %v331, 4294901760
        %803 = vmatpush1.msra.mxu0 %v802
        %804 = vmatprep.subr.mxu0 0.0
        %v805 = vand.u32 %v330, 4294901760
        %806 = vmatpush1.msra.mxu0 %v805
        %807 = vmatprep.subr.mxu0 0.0
        %v808 = vand.u32 %v329, 4294901760
        %809 = vmatpush1.msra.mxu0 %v808
        %810 = vmatprep.subr.mxu0 0.0
        %v811 = vand.u32 %v328, 4294901760
        %812 = vmatpush1.msra.mxu0 %v811
        %813 = vmatprep.subr.mxu0 0.0
        %v814 = vand.u32 %v327, 4294901760
        %815 = vmatpush1.msra.mxu0 %v814
        %816 = vmatprep.subr.mxu0 0.0
        %v817 = vand.u32 %v326, 4294901760
        %818 = vmatpush1.msra.mxu0 %v817
        %819 = vmatprep.subr.mxu0 0.0
        %v820 = vand.u32 %v325, 4294901760
        %821 = vmatpush1.msra.mxu0 %v820
        %822 = vmatprep.subr.mxu0 0.0
        %v823 = vand.u32 %v324, 4294901760
        %824 = vmatpush1.msra.mxu0 %v823
        %825 = vmatprep.subr.mxu0 0.0
        %v826 = vand.u32 %v323, 4294901760
        %827 = vmatpush1.msra.mxu0 %v826
        %828 = vmatprep.subr.mxu0 0.0
        %v829 = vand.u32 %v322, 4294901760
        %830 = vmatpush1.msra.mxu0 %v829
        %831 = vmatprep.subr.mxu0 0.0
        %v832 = vand.u32 %v321, 4294901760
        %833 = vmatpush1.msra.mxu0 %v832
        %834 = vmatprep.subr.mxu0 0.0
        %v835 = vand.u32 %v320, 4294901760
        %836 = vmatpush1.msra.mxu0 %v835
        %837 = vmatprep.subr.mxu0 0.0
        %838 = vmatpush2.msra.mxu0 0.0
        %839 = vmatprep.subr.mxu0 0.0
        %840 = vmatpush2.msra.mxu0 0.0
        %841 = vmatprep.subr.mxu0 0.0
        %842 = vmatpush2.msra.mxu0 0.0
        %843 = vmatprep.subr.mxu0 0.0
        %844 = vmatpush2.msra.mxu0 0.0
        %845 = vmatprep.subr.mxu0 0.0
        %846 = vmatpush2.msra.mxu0 0.0
        %847 = vmatprep.subr.mxu0 0.0
        %848 = vmatpush2.msra.mxu0 0.0
        %849 = vmatprep.subr.mxu0 0.0
        %850 = vmatpush2.msra.mxu0 0.0
        %851 = vmatprep.subr.mxu0 0.0
        %852 = vmatpush2.msra.mxu0 0.0
        %853 = vmatprep.subr.mxu0 0.0
        %854 = vmatpush2.msra.mxu0 0.0
        %855 = vmatprep.subr.mxu0 0.0
        %856 = vmatpush2.msra.mxu0 0.0
        %857 = vmatprep.subr.mxu0 0.0
        %858 = vmatpush2.msra.mxu0 0.0
        %859 = vmatprep.subr.mxu0 0.0
        %860 = vmatpush2.msra.mxu0 0.0
        %861 = vmatprep.subr.mxu0 0.0
        %862 = vmatpush2.msra.mxu0 0.0
        %863 = vmatprep.subr.mxu0 0.0
        %864 = vmatpush2.msra.mxu0 0.0
        %865 = vmatprep.subr.mxu0 0.0
        %866 = vmatpush2.msra.mxu0 0.0
        %867 = vmatprep.subr.mxu0 0.0
        %868 = vmatpush2.msra.mxu0 0.0
        %869 = vmatprep.mubr.f32.mxu0 0.0
        %v870 = vand.u32 %v319, 4294901760
        %v871 = vsub.f32 %v319, %v870
        %v872 = vand.u32 %v871, 4294901760
        %v873 = vsub.f32 %v871, %v872
        %v874 = vand.u32 %v873, 4294901760
        %875 = vmatmul.mubr.f32.gmra.mxu0 %v874
        %v876 = vpop.f32.mrf.mxu0
        %v877 = vadd.f32 %v788, %v876
        %v878 = vpop.f32.mrf.mxu0
        %879 = vdwg.mxu0
        %880 = vmatprep.subr.mxu0 0.0
        %v881 = vand.u32 %v335, 4294901760
        %v882 = vsub.f32 %v335, %v881
        %v883 = vand.u32 %v882, 4294901760
        %v884 = vsub.f32 %v882, %v883
        %v885 = vand.u32 %v884, 4294901760
        %886 = vmatpush1.msra.mxu0 %v885
        %887 = vmatprep.subr.mxu0 0.0
        %v888 = vand.u32 %v334, 4294901760
        %v889 = vsub.f32 %v334, %v888
        %v890 = vand.u32 %v889, 4294901760
        %v891 = vsub.f32 %v889, %v890
        %v892 = vand.u32 %v891, 4294901760
        %893 = vmatpush1.msra.mxu0 %v892
        %894 = vmatprep.subr.mxu0 0.0
        %v895 = vand.u32 %v333, 4294901760
        %v896 = vsub.f32 %v333, %v895
        %v897 = vand.u32 %v896, 4294901760
        %v898 = vsub.f32 %v896, %v897
        %v899 = vand.u32 %v898, 4294901760
        %900 = vmatpush1.msra.mxu0 %v899
        %901 = vmatprep.subr.mxu0 0.0
        %v902 = vand.u32 %v332, 4294901760
        %v903 = vsub.f32 %v332, %v902
        %v904 = vand.u32 %v903, 4294901760
        %v905 = vsub.f32 %v903, %v904
        %v906 = vand.u32 %v905, 4294901760
        %907 = vmatpush1.msra.mxu0 %v906
        %908 = vmatprep.subr.mxu0 0.0
        %v909 = vand.u32 %v331, 4294901760
        %v910 = vsub.f32 %v331, %v909
        %v911 = vand.u32 %v910, 4294901760
        %v912 = vsub.f32 %v910, %v911
        %v913 = vand.u32 %v912, 4294901760
        %914 = vmatpush1.msra.mxu0 %v913
        %915 = vmatprep.subr.mxu0 0.0
        %v916 = vand.u32 %v330, 4294901760
        %v917 = vsub.f32 %v330, %v916
        %v918 = vand.u32 %v917, 4294901760
        %v919 = vsub.f32 %v917, %v918
        %v920 = vand.u32 %v919, 4294901760
        %921 = vmatpush1.msra.mxu0 %v920
        %922 = vmatprep.subr.mxu0 0.0
        %v923 = vand.u32 %v329, 4294901760
        %v924 = vsub.f32 %v329, %v923
        %v925 = vand.u32 %v924, 4294901760
        %v926 = vsub.f32 %v924, %v925
        %v927 = vand.u32 %v926, 4294901760
        %928 = vmatpush1.msra.mxu0 %v927
        %929 = vmatprep.subr.mxu0 0.0
        %v930 = vand.u32 %v328, 4294901760
        %v931 = vsub.f32 %v328, %v930
        %v932 = vand.u32 %v931, 4294901760
        %v933 = vsub.f32 %v931, %v932
        %v934 = vand.u32 %v933, 4294901760
        %935 = vmatpush1.msra.mxu0 %v934
        %936 = vmatprep.subr.mxu0 0.0
        %v937 = vand.u32 %v327, 4294901760
        %v938 = vsub.f32 %v327, %v937
        %v939 = vand.u32 %v938, 4294901760
        %v940 = vsub.f32 %v938, %v939
        %v941 = vand.u32 %v940, 4294901760
        %942 = vmatpush1.msra.mxu0 %v941
        %943 = vmatprep.subr.mxu0 0.0
        %v944 = vand.u32 %v326, 4294901760
        %v945 = vsub.f32 %v326, %v944
        %v946 = vand.u32 %v945, 4294901760
        %v947 = vsub.f32 %v945, %v946
        %v948 = vand.u32 %v947, 4294901760
        %949 = vmatpush1.msra.mxu0 %v948
        %950 = vmatprep.subr.mxu0 0.0
        %v951 = vand.u32 %v325, 4294901760
        %v952 = vsub.f32 %v325, %v951
        %v953 = vand.u32 %v952, 4294901760
        %v954 = vsub.f32 %v952, %v953
        %v955 = vand.u32 %v954, 4294901760
        %956 = vmatpush1.msra.mxu0 %v955
        %957 = vmatprep.subr.mxu0 0.0
        %v958 = vand.u32 %v324, 4294901760
        %v959 = vsub.f32 %v324, %v958
        %v960 = vand.u32 %v959, 4294901760
        %v961 = vsub.f32 %v959, %v960
        %v962 = vand.u32 %v961, 4294901760
        %963 = vmatpush1.msra.mxu0 %v962
        %964 = vmatprep.subr.mxu0 0.0
        %v965 = vand.u32 %v323, 4294901760
        %v966 = vsub.f32 %v323, %v965
        %v967 = vand.u32 %v966, 4294901760
        %v968 = vsub.f32 %v966, %v967
        %v969 = vand.u32 %v968, 4294901760
        %970 = vmatpush1.msra.mxu0 %v969
        %971 = vmatprep.subr.mxu0 0.0
        %v972 = vand.u32 %v322, 4294901760
        %v973 = vsub.f32 %v322, %v972
        %v974 = vand.u32 %v973, 4294901760
        %v975 = vsub.f32 %v973, %v974
        %v976 = vand.u32 %v975, 4294901760
        %977 = vmatpush1.msra.mxu0 %v976
        %978 = vmatprep.subr.mxu0 0.0
        %v979 = vand.u32 %v321, 4294901760
        %v980 = vsub.f32 %v321, %v979
        %v981 = vand.u32 %v980, 4294901760
        %v982 = vsub.f32 %v980, %v981
        %v983 = vand.u32 %v982, 4294901760
        %984 = vmatpush1.msra.mxu0 %v983
        %985 = vmatprep.subr.mxu0 0.0
        %v986 = vand.u32 %v320, 4294901760
        %v987 = vsub.f32 %v320, %v986
        %v988 = vand.u32 %v987, 4294901760
        %v989 = vsub.f32 %v987, %v988
        %v990 = vand.u32 %v989, 4294901760
        %991 = vmatpush1.msra.mxu0 %v990
        %992 = vmatprep.subr.mxu0 0.0
        %993 = vmatpush2.msra.mxu0 0.0
        %994 = vmatprep.subr.mxu0 0.0
        %995 = vmatpush2.msra.mxu0 0.0
        %996 = vmatprep.subr.mxu0 0.0
        %997 = vmatpush2.msra.mxu0 0.0
        %998 = vmatprep.subr.mxu0 0.0
        %999 = vmatpush2.msra.mxu0 0.0
        %1000 = vmatprep.subr.mxu0 0.0
        %1001 = vmatpush2.msra.mxu0 0.0
        %1002 = vmatprep.subr.mxu0 0.0
        %1003 = vmatpush2.msra.mxu0 0.0
        %1004 = vmatprep.subr.mxu0 0.0
        %1005 = vmatpush2.msra.mxu0 0.0
        %1006 = vmatprep.subr.mxu0 0.0
        %1007 = vmatpush2.msra.mxu0 0.0
        %1008 = vmatprep.subr.mxu0 0.0
        %1009 = vmatpush2.msra.mxu0 0.0
        %1010 = vmatprep.subr.mxu0 0.0
        %1011 = vmatpush2.msra.mxu0 0.0
        %1012 = vmatprep.subr.mxu0 0.0
        %1013 = vmatpush2.msra.mxu0 0.0
        %1014 = vmatprep.subr.mxu0 0.0
        %1015 = vmatpush2.msra.mxu0 0.0
        %1016 = vmatprep.subr.mxu0 0.0
        %1017 = vmatpush2.msra.mxu0 0.0
        %1018 = vmatprep.subr.mxu0 0.0
        %1019 = vmatpush2.msra.mxu0 0.0
        %1020 = vmatprep.subr.mxu0 0.0
        %1021 = vmatpush2.msra.mxu0 0.0
        %1022 = vmatprep.subr.mxu0 0.0
        %1023 = vmatpush2.msra.mxu0 0.0
        %1024 = vmatprep.mubr.f32.mxu0 0.0
        %v1025 = vand.u32 %v319, 4294901760
        %1026 = vmatmul.mubr.f32.gmra.mxu0 %v1025
        %v1027 = vpop.f32.mrf.mxu0
        %v1028 = vadd.f32 %v877, %v1027
        %v1029 = vpop.f32.mrf.mxu0
        %1030 = vdwg.mxu0
        %1031 = vmatprep.subr.mxu0 0.0
        %v1032 = vand.u32 %v335, 4294901760
        %v1033 = vsub.f32 %v335, %v1032
        %1034 = vmatpush1.msra.mxu0 %v1033
        %1035 = vmatprep.subr.mxu0 0.0
        %v1036 = vand.u32 %v334, 4294901760
        %v1037 = vsub.f32 %v334, %v1036
        %1038 = vmatpush1.msra.mxu0 %v1037
        %1039 = vmatprep.subr.mxu0 0.0
        %v1040 = vand.u32 %v333, 4294901760
        %v1041 = vsub.f32 %v333, %v1040
        %1042 = vmatpush1.msra.mxu0 %v1041
        %1043 = vmatprep.subr.mxu0 0.0
        %v1044 = vand.u32 %v332, 4294901760
        %v1045 = vsub.f32 %v332, %v1044
        %1046 = vmatpush1.msra.mxu0 %v1045
        %1047 = vmatprep.subr.mxu0 0.0
        %v1048 = vand.u32 %v331, 4294901760
        %v1049 = vsub.f32 %v331, %v1048
        %1050 = vmatpush1.msra.mxu0 %v1049
        %1051 = vmatprep.subr.mxu0 0.0
        %v1052 = vand.u32 %v330, 4294901760
        %v1053 = vsub.f32 %v330, %v1052
        %1054 = vmatpush1.msra.mxu0 %v1053
        %1055 = vmatprep.subr.mxu0 0.0
        %v1056 = vand.u32 %v329, 4294901760
        %v1057 = vsub.f32 %v329, %v1056
        %1058 = vmatpush1.msra.mxu0 %v1057
        %1059 = vmatprep.subr.mxu0 0.0
        %v1060 = vand.u32 %v328, 4294901760
        %v1061 = vsub.f32 %v328, %v1060
        %1062 = vmatpush1.msra.mxu0 %v1061
        %1063 = vmatprep.subr.mxu0 0.0
        %v1064 = vand.u32 %v327, 4294901760
        %v1065 = vsub.f32 %v327, %v1064
        %1066 = vmatpush1.msra.mxu0 %v1065
        %1067 = vmatprep.subr.mxu0 0.0
        %v1068 = vand.u32 %v326, 4294901760
        %v1069 = vsub.f32 %v326, %v1068
        %1070 = vmatpush1.msra.mxu0 %v1069
        %1071 = vmatprep.subr.mxu0 0.0
        %v1072 = vand.u32 %v325, 4294901760
        %v1073 = vsub.f32 %v325, %v1072
        %1074 = vmatpush1.msra.mxu0 %v1073
        %1075 = vmatprep.subr.mxu0 0.0
        %v1076 = vand.u32 %v324, 4294901760
        %v1077 = vsub.f32 %v324, %v1076
        %1078 = vmatpush1.msra.mxu0 %v1077
        %1079 = vmatprep.subr.mxu0 0.0
        %v1080 = vand.u32 %v323, 4294901760
        %v1081 = vsub.f32 %v323, %v1080
        %1082 = vmatpush1.msra.mxu0 %v1081
        %1083 = vmatprep.subr.mxu0 0.0
        %v1084 = vand.u32 %v322, 4294901760
        %v1085 = vsub.f32 %v322, %v1084
        %1086 = vmatpush1.msra.mxu0 %v1085
        %1087 = vmatprep.subr.mxu0 0.0
        %v1088 = vand.u32 %v321, 4294901760
        %v1089 = vsub.f32 %v321, %v1088
        %1090 = vmatpush1.msra.mxu0 %v1089
        %1091 = vmatprep.subr.mxu0 0.0
        %v1092 = vand.u32 %v320, 4294901760
        %v1093 = vsub.f32 %v320, %v1092
        %1094 = vmatpush1.msra.mxu0 %v1093
        %1095 = vmatprep.subr.mxu0 0.0
        %1096 = vmatpush2.msra.mxu0 0.0
        %1097 = vmatprep.subr.mxu0 0.0
        %1098 = vmatpush2.msra.mxu0 0.0
        %1099 = vmatprep.subr.mxu0 0.0
        %1100 = vmatpush2.msra.mxu0 0.0
        %1101 = vmatprep.subr.mxu0 0.0
        %1102 = vmatpush2.msra.mxu0 0.0
        %1103 = vmatprep.subr.mxu0 0.0
        %1104 = vmatpush2.msra.mxu0 0.0
        %1105 = vmatprep.subr.mxu0 0.0
        %1106 = vmatpush2.msra.mxu0 0.0
        %1107 = vmatprep.subr.mxu0 0.0
        %1108 = vmatpush2.msra.mxu0 0.0
        %1109 = vmatprep.subr.mxu0 0.0
        %1110 = vmatpush2.msra.mxu0 0.0
        %1111 = vmatprep.subr.mxu0 0.0
        %1112 = vmatpush2.msra.mxu0 0.0
        %1113 = vmatprep.subr.mxu0 0.0
        %1114 = vmatpush2.msra.mxu0 0.0
        %1115 = vmatprep.subr.mxu0 0.0
        %1116 = vmatpush2.msra.mxu0 0.0
        %1117 = vmatprep.subr.mxu0 0.0
        %1118 = vmatpush2.msra.mxu0 0.0
        %1119 = vmatprep.subr.mxu0 0.0
        %1120 = vmatpush2.msra.mxu0 0.0
        %1121 = vmatprep.subr.mxu0 0.0
        %1122 = vmatpush2.msra.mxu0 0.0
        %1123 = vmatprep.subr.mxu0 0.0
        %1124 = vmatpush2.msra.mxu0 0.0
        %1125 = vmatprep.subr.mxu0 0.0
        %1126 = vmatpush2.msra.mxu0 0.0
        %1127 = vmatprep.mubr.f32.mxu0 0.0
        %v1128 = vand.u32 %v319, 4294901760
        %v1129 = vsub.f32 %v319, %v1128
        %1130 = vmatmul.mubr.f32.gmra.mxu0 %v1129
        %v1131 = vpop.f32.mrf.mxu0
        %v1132 = vadd.f32 %v1028, %v1131
        %v1133 = vpop.f32.mrf.mxu0
        %1134 = vdwg.mxu0
        %1135 = vmatprep.subr.mxu0 0.0
        %v1136 = vand.u32 %v335, 4294901760
        %1137 = vmatpush1.msra.mxu0 %v1136
        %1138 = vmatprep.subr.mxu0 0.0
        %v1139 = vand.u32 %v334, 4294901760
        %1140 = vmatpush1.msra.mxu0 %v1139
        %1141 = vmatprep.subr.mxu0 0.0
        %v1142 = vand.u32 %v333, 4294901760
        %1143 = vmatpush1.msra.mxu0 %v1142
        %1144 = vmatprep.subr.mxu0 0.0
        %v1145 = vand.u32 %v332, 4294901760
        %1146 = vmatpush1.msra.mxu0 %v1145
        %1147 = vmatprep.subr.mxu0 0.0
        %v1148 = vand.u32 %v331, 4294901760
        %1149 = vmatpush1.msra.mxu0 %v1148
        %1150 = vmatprep.subr.mxu0 0.0
        %v1151 = vand.u32 %v330, 4294901760
        %1152 = vmatpush1.msra.mxu0 %v1151
        %1153 = vmatprep.subr.mxu0 0.0
        %v1154 = vand.u32 %v329, 4294901760
        %1155 = vmatpush1.msra.mxu0 %v1154
        %1156 = vmatprep.subr.mxu0 0.0
        %v1157 = vand.u32 %v328, 4294901760
        %1158 = vmatpush1.msra.mxu0 %v1157
        %1159 = vmatprep.subr.mxu0 0.0
        %v1160 = vand.u32 %v327, 4294901760
        %1161 = vmatpush1.msra.mxu0 %v1160
        %1162 = vmatprep.subr.mxu0 0.0
        %v1163 = vand.u32 %v326, 4294901760
        %1164 = vmatpush1.msra.mxu0 %v1163
        %1165 = vmatprep.subr.mxu0 0.0
        %v1166 = vand.u32 %v325, 4294901760
        %1167 = vmatpush1.msra.mxu0 %v1166
        %1168 = vmatprep.subr.mxu0 0.0
        %v1169 = vand.u32 %v324, 4294901760
        %1170 = vmatpush1.msra.mxu0 %v1169
        %1171 = vmatprep.subr.mxu0 0.0
        %v1172 = vand.u32 %v323, 4294901760
        %1173 = vmatpush1.msra.mxu0 %v1172
        %1174 = vmatprep.subr.mxu0 0.0
        %v1175 = vand.u32 %v322, 4294901760
        %1176 = vmatpush1.msra.mxu0 %v1175
        %1177 = vmatprep.subr.mxu0 0.0
        %v1178 = vand.u32 %v321, 4294901760
        %1179 = vmatpush1.msra.mxu0 %v1178
        %1180 = vmatprep.subr.mxu0 0.0
        %v1181 = vand.u32 %v320, 4294901760
        %1182 = vmatpush1.msra.mxu0 %v1181
        %1183 = vmatprep.subr.mxu0 0.0
        %1184 = vmatpush2.msra.mxu0 0.0
        %1185 = vmatprep.subr.mxu0 0.0
        %1186 = vmatpush2.msra.mxu0 0.0
        %1187 = vmatprep.subr.mxu0 0.0
        %1188 = vmatpush2.msra.mxu0 0.0
        %1189 = vmatprep.subr.mxu0 0.0
        %1190 = vmatpush2.msra.mxu0 0.0
        %1191 = vmatprep.subr.mxu0 0.0
        %1192 = vmatpush2.msra.mxu0 0.0
        %1193 = vmatprep.subr.mxu0 0.0
        %1194 = vmatpush2.msra.mxu0 0.0
        %1195 = vmatprep.subr.mxu0 0.0
        %1196 = vmatpush2.msra.mxu0 0.0
        %1197 = vmatprep.subr.mxu0 0.0
        %1198 = vmatpush2.msra.mxu0 0.0
        %1199 = vmatprep.subr.mxu0 0.0
        %1200 = vmatpush2.msra.mxu0 0.0
        %1201 = vmatprep.subr.mxu0 0.0
        %1202 = vmatpush2.msra.mxu0 0.0
        %1203 = vmatprep.subr.mxu0 0.0
        %1204 = vmatpush2.msra.mxu0 0.0
        %1205 = vmatprep.subr.mxu0 0.0
        %1206 = vmatpush2.msra.mxu0 0.0
        %1207 = vmatprep.subr.mxu0 0.0
        %1208 = vmatpush2.msra.mxu0 0.0
        %1209 = vmatprep.subr.mxu0 0.0
        %1210 = vmatpush2.msra.mxu0 0.0
        %1211 = vmatprep.subr.mxu0 0.0
        %1212 = vmatpush2.msra.mxu0 0.0
        %1213 = vmatprep.subr.mxu0 0.0
        %1214 = vmatpush2.msra.mxu0 0.0
        %1215 = vmatprep.mubr.f32.mxu0 0.0
        %v1216 = vand.u32 %v319, 4294901760
        %v1217 = vsub.f32 %v319, %v1216
        %v1218 = vand.u32 %v1217, 4294901760
        %1219 = vmatmul.mubr.f32.gmra.mxu0 %v1218
        %v1220 = vpop.f32.mrf.mxu0
        %v1221 = vadd.f32 %v1132, %v1220
        %v1222 = vpop.f32.mrf.mxu0
        %1223 = vdwg.mxu0
        %1224 = vmatprep.subr.mxu0 0.0
        %v1225 = vand.u32 %v335, 4294901760
        %v1226 = vsub.f32 %v335, %v1225
        %v1227 = vand.u32 %v1226, 4294901760
        %1228 = vmatpush1.msra.mxu0 %v1227
        %1229 = vmatprep.subr.mxu0 0.0
        %v1230 = vand.u32 %v334, 4294901760
        %v1231 = vsub.f32 %v334, %v1230
        %v1232 = vand.u32 %v1231, 4294901760
        %1233 = vmatpush1.msra.mxu0 %v1232
        %1234 = vmatprep.subr.mxu0 0.0
        %v1235 = vand.u32 %v333, 4294901760
        %v1236 = vsub.f32 %v333, %v1235
        %v1237 = vand.u32 %v1236, 4294901760
        %1238 = vmatpush1.msra.mxu0 %v1237
        %1239 = vmatprep.subr.mxu0 0.0
        %v1240 = vand.u32 %v332, 4294901760
        %v1241 = vsub.f32 %v332, %v1240
        %v1242 = vand.u32 %v1241, 4294901760
        %1243 = vmatpush1.msra.mxu0 %v1242
        %1244 = vmatprep.subr.mxu0 0.0
        %v1245 = vand.u32 %v331, 4294901760
        %v1246 = vsub.f32 %v331, %v1245
        %v1247 = vand.u32 %v1246, 4294901760
        %1248 = vmatpush1.msra.mxu0 %v1247
        %1249 = vmatprep.subr.mxu0 0.0
        %v1250 = vand.u32 %v330, 4294901760
        %v1251 = vsub.f32 %v330, %v1250
        %v1252 = vand.u32 %v1251, 4294901760
        %1253 = vmatpush1.msra.mxu0 %v1252
        %1254 = vmatprep.subr.mxu0 0.0
        %v1255 = vand.u32 %v329, 4294901760
        %v1256 = vsub.f32 %v329, %v1255
        %v1257 = vand.u32 %v1256, 4294901760
        %1258 = vmatpush1.msra.mxu0 %v1257
        %1259 = vmatprep.subr.mxu0 0.0
        %v1260 = vand.u32 %v328, 4294901760
        %v1261 = vsub.f32 %v328, %v1260
        %v1262 = vand.u32 %v1261, 4294901760
        %1263 = vmatpush1.msra.mxu0 %v1262
        %1264 = vmatprep.subr.mxu0 0.0
        %v1265 = vand.u32 %v327, 4294901760
        %v1266 = vsub.f32 %v327, %v1265
        %v1267 = vand.u32 %v1266, 4294901760
        %1268 = vmatpush1.msra.mxu0 %v1267
        %1269 = vmatprep.subr.mxu0 0.0
        %v1270 = vand.u32 %v326, 4294901760
        %v1271 = vsub.f32 %v326, %v1270
        %v1272 = vand.u32 %v1271, 4294901760
        %1273 = vmatpush1.msra.mxu0 %v1272
        %1274 = vmatprep.subr.mxu0 0.0
        %v1275 = vand.u32 %v325, 4294901760
        %v1276 = vsub.f32 %v325, %v1275
        %v1277 = vand.u32 %v1276, 4294901760
        %1278 = vmatpush1.msra.mxu0 %v1277
        %1279 = vmatprep.subr.mxu0 0.0
        %v1280 = vand.u32 %v324, 4294901760
        %v1281 = vsub.f32 %v324, %v1280
        %v1282 = vand.u32 %v1281, 4294901760
        %1283 = vmatpush1.msra.mxu0 %v1282
        %1284 = vmatprep.subr.mxu0 0.0
        %v1285 = vand.u32 %v323, 4294901760
        %v1286 = vsub.f32 %v323, %v1285
        %v1287 = vand.u32 %v1286, 4294901760
        %1288 = vmatpush1.msra.mxu0 %v1287
        %1289 = vmatprep.subr.mxu0 0.0
        %v1290 = vand.u32 %v322, 4294901760
        %v1291 = vsub.f32 %v322, %v1290
        %v1292 = vand.u32 %v1291, 4294901760
        %1293 = vmatpush1.msra.mxu0 %v1292
        %1294 = vmatprep.subr.mxu0 0.0
        %v1295 = vand.u32 %v321, 4294901760
        %v1296 = vsub.f32 %v321, %v1295
        %v1297 = vand.u32 %v1296, 4294901760
        %1298 = vmatpush1.msra.mxu0 %v1297
        %1299 = vmatprep.subr.mxu0 0.0
        %v1300 = vand.u32 %v320, 4294901760
        %v1301 = vsub.f32 %v320, %v1300
        %v1302 = vand.u32 %v1301, 4294901760
        %1303 = vmatpush1.msra.mxu0 %v1302
        %1304 = vmatprep.subr.mxu0 0.0
        %1305 = vmatpush2.msra.mxu0 0.0
        %1306 = vmatprep.subr.mxu0 0.0
        %1307 = vmatpush2.msra.mxu0 0.0
        %1308 = vmatprep.subr.mxu0 0.0
        %1309 = vmatpush2.msra.mxu0 0.0
        %1310 = vmatprep.subr.mxu0 0.0
        %1311 = vmatpush2.msra.mxu0 0.0
        %1312 = vmatprep.subr.mxu0 0.0
        %1313 = vmatpush2.msra.mxu0 0.0
        %1314 = vmatprep.subr.mxu0 0.0
        %1315 = vmatpush2.msra.mxu0 0.0
        %1316 = vmatprep.subr.mxu0 0.0
        %1317 = vmatpush2.msra.mxu0 0.0
        %1318 = vmatprep.subr.mxu0 0.0
        %1319 = vmatpush2.msra.mxu0 0.0
        %1320 = vmatprep.subr.mxu0 0.0
        %1321 = vmatpush2.msra.mxu0 0.0
        %1322 = vmatprep.subr.mxu0 0.0
        %1323 = vmatpush2.msra.mxu0 0.0
        %1324 = vmatprep.subr.mxu0 0.0
        %1325 = vmatpush2.msra.mxu0 0.0
        %1326 = vmatprep.subr.mxu0 0.0
        %1327 = vmatpush2.msra.mxu0 0.0
        %1328 = vmatprep.subr.mxu0 0.0
        %1329 = vmatpush2.msra.mxu0 0.0
        %1330 = vmatprep.subr.mxu0 0.0
        %1331 = vmatpush2.msra.mxu0 0.0
        %1332 = vmatprep.subr.mxu0 0.0
        %1333 = vmatpush2.msra.mxu0 0.0
        %1334 = vmatprep.subr.mxu0 0.0
        %1335 = vmatpush2.msra.mxu0 0.0
        %1336 = vmatprep.mubr.f32.mxu0 0.0
        %v1337 = vand.u32 %v319, 4294901760
        %1338 = vmatmul.mubr.f32.gmra.mxu0 %v1337
        %v1339 = vpop.f32.mrf.mxu0
        %v1340 = vadd.f32 %v1221, %v1339
        %v1341 = vpop.f32.mrf.mxu0
        %1342 = vdwg.mxu0
        %1343 = vmatprep.subr.mxu0 0.0
        %v1344 = vand.u32 %v335, 4294901760
        %1345 = vmatpush1.msra.mxu0 %v1344
        %1346 = vmatprep.subr.mxu0 0.0
        %v1347 = vand.u32 %v334, 4294901760
        %1348 = vmatpush1.msra.mxu0 %v1347
        %1349 = vmatprep.subr.mxu0 0.0
        %v1350 = vand.u32 %v333, 4294901760
        %1351 = vmatpush1.msra.mxu0 %v1350
        %1352 = vmatprep.subr.mxu0 0.0
        %v1353 = vand.u32 %v332, 4294901760
        %1354 = vmatpush1.msra.mxu0 %v1353
        %1355 = vmatprep.subr.mxu0 0.0
        %v1356 = vand.u32 %v331, 4294901760
        %1357 = vmatpush1.msra.mxu0 %v1356
        %1358 = vmatprep.subr.mxu0 0.0
        %v1359 = vand.u32 %v330, 4294901760
        %1360 = vmatpush1.msra.mxu0 %v1359
        %1361 = vmatprep.subr.mxu0 0.0
        %v1362 = vand.u32 %v329, 4294901760
        %1363 = vmatpush1.msra.mxu0 %v1362
        %1364 = vmatprep.subr.mxu0 0.0
        %v1365 = vand.u32 %v328, 4294901760
        %1366 = vmatpush1.msra.mxu0 %v1365
        %1367 = vmatprep.subr.mxu0 0.0
        %v1368 = vand.u32 %v327, 4294901760
        %1369 = vmatpush1.msra.mxu0 %v1368
        %1370 = vmatprep.subr.mxu0 0.0
        %v1371 = vand.u32 %v326, 4294901760
        %1372 = vmatpush1.msra.mxu0 %v1371
        %1373 = vmatprep.subr.mxu0 0.0
        %v1374 = vand.u32 %v325, 4294901760
        %1375 = vmatpush1.msra.mxu0 %v1374
        %1376 = vmatprep.subr.mxu0 0.0
        %v1377 = vand.u32 %v324, 4294901760
        %1378 = vmatpush1.msra.mxu0 %v1377
        %1379 = vmatprep.subr.mxu0 0.0
        %v1380 = vand.u32 %v323, 4294901760
        %1381 = vmatpush1.msra.mxu0 %v1380
        %1382 = vmatprep.subr.mxu0 0.0
        %v1383 = vand.u32 %v322, 4294901760
        %1384 = vmatpush1.msra.mxu0 %v1383
        %1385 = vmatprep.subr.mxu0 0.0
        %v1386 = vand.u32 %v321, 4294901760
        %1387 = vmatpush1.msra.mxu0 %v1386
        %1388 = vmatprep.subr.mxu0 0.0
        %v1389 = vand.u32 %v320, 4294901760
        %1390 = vmatpush1.msra.mxu0 %v1389
        %1391 = vmatprep.subr.mxu0 0.0
        %1392 = vmatpush2.msra.mxu0 0.0
        %1393 = vmatprep.subr.mxu0 0.0
        %1394 = vmatpush2.msra.mxu0 0.0
        %1395 = vmatprep.subr.mxu0 0.0
        %1396 = vmatpush2.msra.mxu0 0.0
        %1397 = vmatprep.subr.mxu0 0.0
        %1398 = vmatpush2.msra.mxu0 0.0
        %1399 = vmatprep.subr.mxu0 0.0
        %1400 = vmatpush2.msra.mxu0 0.0
        %1401 = vmatprep.subr.mxu0 0.0
        %1402 = vmatpush2.msra.mxu0 0.0
        %1403 = vmatprep.subr.mxu0 0.0
        %1404 = vmatpush2.msra.mxu0 0.0
        %1405 = vmatprep.subr.mxu0 0.0
        %1406 = vmatpush2.msra.mxu0 0.0
        %1407 = vmatprep.subr.mxu0 0.0
        %1408 = vmatpush2.msra.mxu0 0.0
        %1409 = vmatprep.subr.mxu0 0.0
        %1410 = vmatpush2.msra.mxu0 0.0
        %1411 = vmatprep.subr.mxu0 0.0
        %1412 = vmatpush2.msra.mxu0 0.0
        %1413 = vmatprep.subr.mxu0 0.0
        %1414 = vmatpush2.msra.mxu0 0.0
        %1415 = vmatprep.subr.mxu0 0.0
        %1416 = vmatpush2.msra.mxu0 0.0
        %1417 = vmatprep.subr.mxu0 0.0
        %1418 = vmatpush2.msra.mxu0 0.0
        %1419 = vmatprep.subr.mxu0 0.0
        %1420 = vmatpush2.msra.mxu0 0.0
        %1421 = vmatprep.subr.mxu0 0.0
        %1422 = vmatpush2.msra.mxu0 0.0
        %1423 = vmatprep.mubr.f32.mxu0 0.0
        %v1424 = vand.u32 %v319, 4294901760
        %1425 = vmatmul.mubr.f32.gmra.mxu0 %v1424
        %v1426 = vpop.f32.mrf.mxu0
        %v1427 = vadd.f32 %v1340, %v1426
        %v1428 = vpop.f32.mrf.mxu0
        %1429 = vdwg.mxu0
        %v1430 = vld [vmem:[#allocation2] sm:$0x1]
        %v1432 = vlaneseq
        %v1433 = vshrl.u32 %v1432, 7
        %v1434 = vsub.s32 0, %v1433
        %v1435 = vrot.slane %v1430, %v1434
        %1436 = vset.pattern.permute.xlu0 0
        %1437 = vperm.xlu0 %1436, %v1435
        %v1438 = vpop.permute.xlu0 %1437
        %v1440 = vadd.f32 %v1427, %v1438
        %v1441 = vfloor.f32 %v1440
        %v1442 = vsub.f32 %v1440, %v1441
        %v1443 = vmul.f32 %v1442, 2.0
        %v1444 = vsub.f32 1.0, %v1443
        %1445 = vst [vmem:[%s299] sm:$0xff] %v1444
        %1447 = vrot.lane.b32.xlu0 %v1442, 1
        %v1448 = vpop.permute.xlu0 %1447
        %vm1450 = vcmask 7175
        %1451 = vst.msk [vmem:[#allocation2 - $0x7] sm:$0x80] %vm1450, %v1448
        // Predicated region
        $region57: #{tpu_custom_call.1} parent=35 // pred_check
          %p1452 = pneg %p309
        $region58: #{tpu_custom_call.1} parent=35 // pred_check_branch
          %1454 = sbr.rel (%p1452) target = $region60
        $region59: #{tpu_custom_call.1} parent=35 // pred_region
          %v1455 = vmul.f32 %v1442, 6.2831855
          %v1456 = vsub.f32 6.2831855, %v1455
          %v1458 = vrot.slane %v1456, 7
          %1459 = vrot.lane.b32.xlu0 %v1458, 1
          %v1460 = vpop.permute.xlu0 %1459
          %s1461 = vtos %v1460
          %v1462 = vstv %s1461
          %v1464 = vadd.f32 %v1462, 0.0
          %1465 = vst [vmem:[%s306] sm:$0xff] %v1464
        $region60: #{tpu_custom_call.1} parent=35 // pred_fallthru
          _
        %s1466 = sand.u32 %s141, 1
        %s1467 = scalar_lea.sflag [#allocation5], %s1466
        %s1468 = sand.u32 %s141, 1
        %s1469 = smul.addr %s1468, 8
        %s1470 = scalar_lea.vmem [#allocation11], %s1469
        %s1471 = sand.u32 %s167, 1
        %s1472 = scalar_lea.sflag [#allocation13], %s1471
        %s1473 = sand.u32 %s167, 1
        %s1474 = smul.addr %s1473, 8
        %s1475 = scalar_lea.vmem [#allocation12], %s1474
        // Predicated region
        $region61: #{tpu_custom_call.1} parent=35 // pred_check
          %p1476 = pneg %p151
        $region62: #{tpu_custom_call.1} parent=35 // pred_check_branch
          %1478 = sbr.rel (%p1476) target = $region64
        $region63: #{tpu_custom_call.1} parent=35 // pred_region
          %s1479 = sadd.s32 %s32, %s33
          %s1481 = ssub.s32 128, 128
          %1482 = vsyncadd %s1467, %s1481
          %s1483 = smul.addr %s1479, 128
          %s1484 = scalar_lea.hbm %s4, %s1483
          %s1486 = sshll.u32 %s1470, 4
          %s1487 = int_to_ptr.vmem [resolvable:$true] %s1486
          %1489 = dma.vmem_to_hbm [thread:$0]  %s1487, 128, %s1484, %s1467
        $region64: #{tpu_custom_call.1} parent=35 // pred_fallthru
          _
        // Predicated region
        $region65: #{tpu_custom_call.1} parent=35 // pred_check
          %p1490 = pneg %p177
        $region66: #{tpu_custom_call.1} parent=35 // pred_check_branch
          %1492 = sbr.rel (%p1490) target = $region68
        $region67: #{tpu_custom_call.1} parent=35 // pred_region
          %s1494 = ssub.s32 128, 128
          %1495 = vsyncadd %s1472, %s1494
          %s1496 = smul.addr %s32, 128
          %s1497 = scalar_lea.hbm %s5, %s1496
          %s1499 = sshll.u32 %s1475, 4
          %s1500 = int_to_ptr.vmem [resolvable:$true] %s1499
          %1502 = dma.vmem_to_hbm [thread:$0]  %s1500, 128, %s1497, %s1472
        $region68: #{tpu_custom_call.1} parent=35 // pred_fallthru
          _
      $region36: #{tpu_custom_call.1} parent=5 // pred_fallthru
        _
      %p1503 = scmp.le.s32.totalorder 2, %s23
      // Predicated region
      $region69: #{tpu_custom_call.1} parent=5 // pred_check
        %p1504 = pneg %p1503
      $region70: #{tpu_custom_call.1} parent=5 // pred_check_branch
        %1506 = sbr.rel (%p1504) target = $region72
      $region71: #{tpu_custom_call.1} parent=5 // pred_region
        %s1507 = ssub.s32 %s23, 2
        // Predicated region
        $region73: #{tpu_custom_call.1} parent=71 // pred_check
          %p1508 = pneg %p157
        $region74: #{tpu_custom_call.1} parent=71 // pred_check_branch
          %1510 = sbr.rel (%p1508) target = $region76
        $region75: #{tpu_custom_call.1} parent=71 // pred_region
          %s1511 = sand.u32 %s142, 1
          %s1512 = scalar_lea.sflag [#allocation5], %s1511
          %s1513 = sand.u32 %s142, 1
          %s1514 = smul.addr %s1513, 8
          %s1515 = scalar_lea.vmem [#allocation11], %s1514
          %1516 = dma.done %s1512, 128
        $region76: #{tpu_custom_call.1} parent=71 // pred_fallthru
          _
        // Predicated region
        $region77: #{tpu_custom_call.1} parent=71 // pred_check
          %p1517 = pneg %p183
        $region78: #{tpu_custom_call.1} parent=71 // pred_check_branch
          %1519 = sbr.rel (%p1517) target = $region80
        $region79: #{tpu_custom_call.1} parent=71 // pred_region
          %s1520 = sand.u32 %s168, 1
          %s1521 = scalar_lea.sflag [#allocation13], %s1520
          %s1522 = sand.u32 %s168, 1
          %s1523 = smul.addr %s1522, 8
          %s1524 = scalar_lea.vmem [#allocation12], %s1523
          %1525 = dma.done %s1521, 128
        $region80: #{tpu_custom_call.1} parent=71 // pred_fallthru
          _
      $region72: #{tpu_custom_call.1} parent=5 // pred_fallthru
        _
    $region6: #{tpu_custom_call.1} parent=1 // loop_footer
      %s27 = sadd.s32 1, %s23
    $region7: #{tpu_custom_call.1} parent=1 // loop_footer_branch
      %22 = sbr.rel target = $region3
    $region8: #{tpu_custom_call.1} parent=1 // loop_exit
      _
    %1526 = vsyncpa [#allocation4], 1
    %s1527 = scalar_lea.sflag [#allocation4], 1
    %1528 = vsyncpa %s1527, 1
    %1529 = vsyncpa [#allocation9], 1
    %1530 = vsyncpa [#allocation5], 1
    %s1531 = scalar_lea.sflag [#allocation5], 1
    %1532 = vsyncpa %s1531, 1
    %1533 = vsyncpa [#allocation13], 1
    %s1534 = scalar_lea.sflag [#allocation13], 1
    %1535 = vsyncpa %s1534, 1
    %1536 = vsyncpa [#allocation6], 1
    %s1537 = scalar_lea.sflag [#allocation6], 1
    %1538 = vsyncpa %s1537, 1

</llo_original>
